<compile_context>
chip_gen: v5e
topology: v5e:2x2
jax: 0.10.0
libtpu: 0.0.40
codegen_flags: <defaults>
</compile_context>

<pallas_src>
import jax
import jax.numpy as jnp
from jax import lax
from jax.experimental import pallas as pl
from jax.experimental.pallas import tpu as pltpu


# ----------------------------- Pallas kernels ------------------------------

def _block_proj_pool_kernel(x_ref, wblk_ref, bblk_ref, wproj_ref, bproj_ref,
                            x1_ref, th_ref, pg_ref, pg_scratch):
    """Wrapped block + fused theta/phi/g projection + 2x2 max-pool of phi/g."""
    ic = th_ref.shape[-1]
    x = x_ref[...]                                              # (tm, c)

    # 1x1 conv with bn3 folded into the weight, + residual, ReLU
    x1 = jnp.maximum(
        jnp.dot(x, wblk_ref[...], preferred_element_type=jnp.float32)
        + bblk_ref[...] + x, 0.0)
    x1_ref[...] = x1

    # theta | phi | g as a single wide matmul (lane-dense output)
    proj = jnp.dot(x1, wproj_ref[...], preferred_element_type=jnp.float32) \
        + bproj_ref[...]                                        # (tm, 3*ic)
    th_ref[...] = proj[:, :ic]

    # MaxPool3d(kernel=(1,2,2)): rows are space-to-depth ordered, so each
    # pooling window is 4 consecutive rows -> max of four stride-4 slabs.
    pg_scratch[...] = proj[:, ic:]                              # (tm, 2*ic)
    n4 = pg_ref.shape[0]                                        # tm // 4
    p0 = pg_scratch[pl.ds(0, n4, stride=4), :]
    p1 = pg_scratch[pl.ds(1, n4, stride=4), :]
    p2 = pg_scratch[pl.ds(2, n4, stride=4), :]
    p3 = pg_scratch[pl.ds(3, n4, stride=4), :]
    pg_ref[...] = jnp.maximum(jnp.maximum(p0, p1), jnp.maximum(p2, p3))


def _attn_kernel(th_ref, pg_ref, x1_ref, ww_ref, bw_ref, o_ref):
    """Per-(video, query-tile) non-local attention + W conv (BN folded) + residual."""
    ic = th_ref.shape[-1]
    theta = th_ref[0]                       # (tq, ic)
    pg = pg_ref[0]                          # (nkv, 2*ic)  == [phi | g]
    phi = pg[:, :ic]
    g = pg[:, ic:]
    xv = x1_ref[0]                          # (tq, c)

    # f = theta @ phi^T  (contract inter-channel dim)
    f = lax.dot_general(theta, phi, (((1,), (1,)), ((), ())),
                        preferred_element_type=jnp.float32)     # (tq, nkv)
    m = jnp.max(f, axis=-1, keepdims=True)
    p = jnp.exp(f - m)
    inv = pl.reciprocal(jnp.sum(p, axis=-1, keepdims=True), approx=True)

    # y = softmax(f) @ g, with the 1/denominator folded in after the matmul
    y = jnp.dot(p, g, preferred_element_type=jnp.float32) * inv  # (tq, ic)

    # W conv with its BatchNorm folded into the weights, + bias + residual
    wy = jnp.dot(y, ww_ref[...], preferred_element_type=jnp.float32)
    o_ref[0] = wy + bw_ref[...] + xv


# ----------------------------- pallas_call glue -----------------------------

def run_block_proj_pool(x_flat, wblk, bblk, wproj, bproj, tm=512):
    rows, c = x_flat.shape
    ic3 = wproj.shape[1]
    ic = ic3 // 3
    tm = min(tm, rows)
    assert rows % tm == 0 and tm % 4 == 0

    return pl.pallas_call(
        _block_proj_pool_kernel,
        out_shape=(
            jax.ShapeDtypeStruct((rows, c), jnp.float32),            # x1
            jax.ShapeDtypeStruct((rows, ic), jnp.float32),           # theta
            jax.ShapeDtypeStruct((rows // 4, 2 * ic), jnp.float32),  # pooled phi|g
        ),
        grid=(rows // tm,),
        in_specs=[
            pl.BlockSpec((tm, c), lambda i: (i, 0)),
            pl.BlockSpec((c, c), lambda i: (0, 0)),
            pl.BlockSpec((1, c), lambda i: (0, 0)),
            pl.BlockSpec((c, ic3), lambda i: (0, 0)),
            pl.BlockSpec((1, ic3), lambda i: (0, 0)),
        ],
        out_specs=[
            pl.BlockSpec((tm, c), lambda i: (i, 0)),
            pl.BlockSpec((tm, ic), lambda i: (i, 0)),
            pl.BlockSpec((tm // 4, 2 * ic), lambda i: (i, 0)),
        ],
        scratch_shapes=[pltpu.VMEM((tm, 2 * ic), jnp.float32)],
        compiler_params=pltpu.CompilerParams(dimension_semantics=("parallel",)),
    )(x_flat, wblk, bblk, wproj, bproj)


def run_attn(theta, pg, x1, ww, bw, tq=128):
    b, nq, ic = theta.shape
    nkv = pg.shape[1]
    c = x1.shape[2]
    tq = min(tq, nq)
    assert nq % tq == 0

    return pl.pallas_call(
        _attn_kernel,
        out_shape=jax.ShapeDtypeStruct((b, nq, c), jnp.float32),
        grid=(b, nq // tq),
        in_specs=[
            pl.BlockSpec((1, tq, ic), lambda v, q: (v, q, 0)),
            pl.BlockSpec((1, nkv, 2 * ic), lambda v, q: (v, 0, 0)),
            pl.BlockSpec((1, tq, c), lambda v, q: (v, q, 0)),
            pl.BlockSpec((ic, c), lambda v, q: (0, 0)),
            pl.BlockSpec((1, c), lambda v, q: (0, 0)),
        ],
        out_specs=pl.BlockSpec((1, tq, c), lambda v, q: (v, q, 0)),
        compiler_params=pltpu.CompilerParams(
            dimension_semantics=("parallel", "parallel")),
    )(theta, pg, x1, ww, bw)


# ------------------------------ forward pass --------------------------------

def nl3d_wrapper_forward(x_nchw, params, n_segment, tm=512, tq=128):
    nt, c, h, w = x_nchw.shape
    assert nt % n_segment == 0 and h % 2 == 0 and w % 2 == 0
    b = nt // n_segment
    t = n_segment
    ic = params["w_proj"].shape[1] // 3
    h2, w2 = h // 2, w // 2
    rows = nt * h * w
    nq = t * h * w
    nkv = t * h2 * w2

    # NCHW -> channels-last, space-to-depth row order (b, t, h2, w2, dh, dw)
    xs = x_nchw.reshape(b, t, c, h2, 2, w2, 2)
    xs = jnp.transpose(xs, (0, 1, 3, 5, 4, 6, 2))        # (b,t,h2,w2,2,2,c)
    x_flat = xs.reshape(rows, c)

    # 1) + 2) + 3) wrapped block, theta/phi/g projections, phi/g max-pool
    x1, theta, pg = run_block_proj_pool(
        x_flat, params["wblk"], params["bblk"],
        params["w_proj"], params["b_proj"], tm=tm)

    # 4) attention + W conv (BN folded) + residual
    z = run_attn(theta.reshape(b, nq, ic),
                 pg.reshape(b, nkv, 2 * ic),
                 x1.reshape(b, nq, c),
                 params["ww"], params["bw"], tq=tq)

    # back to NCHW: (b,t,h2,w2,2,2,c) -> (nt, c, h, w)
    z = z.reshape(b, t, h2, w2, 2, 2, c)
    z = jnp.transpose(z, (0, 1, 6, 2, 4, 3, 5))          # (b,t,c,h2,dh,w2,dw)
    return z.reshape(nt, c, h, w)


# --------------------------- parameter construction -------------------------

def make_params(key, c):
    ic = max(c // 2, 1)
    f32 = jnp.float32
    ks = jax.random.split(key, 11)
    eps = 1e-5

    def conv_w(k, co, ci):
        lim = 1.0 / (ci ** 0.5)
        return jax.random.uniform(k, (co, ci), f32, -lim, lim)

    def conv_b(k, co, ci):
        lim = 1.0 / (ci ** 0.5)
        return jax.random.uniform(k, (co,), f32, -lim, lim)

    def bn_params(k, n):
        k1, k2, k3, k4 = jax.random.split(k, 4)
        gamma = jax.random.uniform(k1, (n,), f32, 0.5, 1.5)
        beta = jax.random.uniform(k2, (n,), f32, -0.5, 0.5)
        mean = jax.random.normal(k3, (n,), f32) * 0.1
        var = jax.random.uniform(k4, (n,), f32, 0.5, 1.5)
        scale = gamma / jnp.sqrt(var + eps)
        shift = beta - mean * scale
        return scale, shift

    # wrapped block tail: 1x1 conv (c->c, no bias) + bn3 (eval), BN folded in
    blk_w = conv_w(ks[0], c, c)                          # (c_out, c_in)
    blk_scale, blk_shift = bn_params(ks[1], c)
    wblk = blk_w.T * blk_scale[None, :]                  # (c_in, c_out)
    bblk = blk_shift.reshape(1, c)

    # non-local theta/phi/g 1x1x1 convs, concatenated into one wide matmul
    wt = conv_w(ks[2], ic, c); bt = conv_b(ks[3], ic, c)
    wp = conv_w(ks[4], ic, c); bp = conv_b(ks[5], ic, c)
    wg = conv_w(ks[6], ic, c); bg = conv_b(ks[7], ic, c)
    w_proj = jnp.concatenate([wt.T, wp.T, wg.T], axis=1)  # (c, 3*ic)
    b_proj = jnp.concatenate([bt, bp, bg]).reshape(1, 3 * ic)

    # W conv + its BatchNorm3d, folded together.
    # NOTE: PyTorch's __init__ sets this BN to gamma=beta=0 (branch outputs 0);
    # non-trivial values are used so the test validates the attention path.
    ww_raw = conv_w(ks[8], c, ic); bw_raw = conv_b(ks[9], c, ic)
    wbn_scale, wbn_shift = bn_params(ks[10], c)
    ww = ww_raw.T * wbn_scale[None, :]                   # (ic, c)
    bw = (bw_raw * wbn_scale + wbn_shift).reshape(1, c)

    return dict(
        # fused/folded params for the Pallas kernels
        wblk=wblk, bblk=bblk, w_proj=w_proj, b_proj=b_proj, ww=ww, bw=bw,
        # raw params for the structure-faithful pure-JAX reference
        blk_w=blk_w, blk_scale=blk_scale, blk_shift=blk_shift,
        wt=wt, bt=bt, wp=wp, bp=bp, wg=wg, bg=bg,
        ww_raw=ww_raw, bw_raw=bw_raw, wbn_scale=wbn_scale, wbn_shift=wbn_shift,
    )


# ------------------------------ pure-JAX reference ---------------------------

def reference_forward(x_nchw, params, n_segment):
    nt, c, h, w = x_nchw.shape
    b = nt // n_segment
    t = n_segment
    ic = params["wt"].shape[0]

    xl = jnp.transpose(x_nchw, (0, 2, 3, 1))                       # (nt,h,w,c)
    h1 = jnp.einsum('nhwc,oc->nhwo', xl, params["blk_w"])
    x1 = jnp.maximum(h1 * params["blk_scale"] + params["blk_shift"] + xl, 0.0)

    xv = x1.reshape(b, t, h, w, c)
    theta = jnp.einsum('bthwc,oc->bthwo', xv, params["wt"]) + params["bt"]
    phi = jnp.einsum('bthwc,oc->bthwo', xv, params["wp"]) + params["bp"]
    g = jnp.einsum('bthwc,oc->bthwo', xv, params["wg"]) + params["bg"]

    def pool(z):  # MaxPool3d(kernel=(1,2,2))
        return z.reshape(b, t, h // 2, 2, w // 2, 2, ic).max(axis=(3, 5)).reshape(b, -1, ic)

    theta = theta.reshape(b, -1, ic)
    phi = pool(phi)
    g = pool(g)

    f = jnp.einsum('bqi,bki->bqk', theta, phi)
    a = jax.nn.softmax(f, axis=-1)
    y = jnp.einsum('bqk,bki->bqi', a, g)
    wy = jnp.einsum('bqi,oi->bqo', y, params["ww_raw"]) + params["bw_raw"]
    wy = wy * params["wbn_scale"] + params["wbn_shift"]
    z = wy + x1.reshape(b, -1, c)
    z = z.reshape(nt, h, w, c)
    return jnp.transpose(z, (0, 3, 1, 2))


# ----------------------------------- main ------------------------------------

if __name__ == "__main__":
    key = jax.random.PRNGKey(0)
    n_segment = 4          # temporal segments (t)
    b_videos = 2           # videos per batch
    c, h, w = 32, 8, 8     # channels (= block.bn3.num_features), spatial
    nt = b_videos * n_segment

    kx, kp = jax.random.split(key)
    x = jax.random.normal(kx, (nt, c, h, w), jnp.float32)
    params = make_params(kp, c)

    out = nl3d_wrapper_forward(x, params, n_segment)
    out = jax.block_until_ready(out)

    ref = reference_forward(x, params, n_segment)
    assert out.shape == (nt, c, h, w)
    err = float(jnp.max(jnp.abs(out - ref)))
    # tolerance accounts for the EUP approx-reciprocal in the softmax epilogue
    assert err < 5e-3, f"mismatch vs reference: {err}"

    print("KERNEL_OK")
</pallas_src>

<mosaic_0001>
module attributes {stable_mosaic.version = 11 : i64} {
  func.func @_block_proj_pool_kernel(%arg0: i32, %arg1: memref<512x32xf32, #tpu.memory_space<vmem>>, %arg2: memref<32x32xf32, #tpu.memory_space<vmem>>, %arg3: memref<1x32xf32, #tpu.memory_space<vmem>>, %arg4: memref<32x48xf32, #tpu.memory_space<vmem>>, %arg5: memref<1x48xf32, #tpu.memory_space<vmem>>, %arg6: memref<512x32xf32, #tpu.memory_space<vmem>>, %arg7: memref<512x16xf32, #tpu.memory_space<vmem>>, %arg8: memref<128x32xf32, #tpu.memory_space<vmem>>, %arg9: memref<512x32xf32, #tpu.memory_space<vmem>>) attributes {dimension_semantics = [#tpu.dimension_semantics<parallel>], iteration_bounds = array<i64: 1>, scalar_prefetch = 0 : i64, scratch_operands = 1 : i64, tpu.core_type = #tpu.core_type<tc>, window_params = [{transform_indices = @transform_0, window_bounds = array<i64: 512, 32>}, {pipeline_mode = #tpu.pipeline_mode<synchronous>, transform_indices = @transform_1, window_bounds = array<i64: 32, 32>}, {pipeline_mode = #tpu.pipeline_mode<synchronous>, transform_indices = @transform_2, window_bounds = array<i64: 1, 32>}, {pipeline_mode = #tpu.pipeline_mode<synchronous>, transform_indices = @transform_3, window_bounds = array<i64: 32, 48>}, {pipeline_mode = #tpu.pipeline_mode<synchronous>, transform_indices = @transform_4, window_bounds = array<i64: 1, 48>}, {transform_indices = @transform_5, window_bounds = array<i64: 512, 32>}, {transform_indices = @transform_6, window_bounds = array<i64: 512, 16>}, {transform_indices = @transform_7, window_bounds = array<i64: 128, 32>}]} {
    %c0 = arith.constant 0 : index
    %c0_0 = arith.constant 0 : index
    %0 = vector.load %arg1[%c0, %c0_0] : memref<512x32xf32, #tpu.memory_space<vmem>>, vector<512x32xf32>
    %c0_1 = arith.constant 0 : index
    %c0_2 = arith.constant 0 : index
    %1 = vector.load %arg2[%c0_1, %c0_2] : memref<32x32xf32, #tpu.memory_space<vmem>>, vector<32x32xf32>
    %cst = arith.constant dense<0.000000e+00> : vector<512x32xf32>
    %2 = tpu.matmul %0, %1, %cst {dimension_numbers = #tpu.dot_dimension_numbers<[1], [0], [0], [1], [0, 0, 1, 1], [], []>} : vector<512x32xf32>, vector<32x32xf32>, vector<512x32xf32> -> vector<512x32xf32>
    %c0_3 = arith.constant 0 : index
    %c0_4 = arith.constant 0 : index
    %3 = vector.load %arg3[%c0_3, %c0_4] : memref<1x32xf32, #tpu.memory_space<vmem>>, vector<1x32xf32>
    %4 = vector.broadcast %3 : vector<1x32xf32> to vector<512x32xf32>
    %5 = arith.addf %2, %4 : vector<512x32xf32>
    %6 = arith.addf %5, %0 : vector<512x32xf32>
    %cst_5 = arith.constant 0.000000e+00 : f32
    %7 = vector.broadcast %cst_5 : f32 to vector<512x32xf32>
    %8 = arith.maximumf %6, %7 : vector<512x32xf32>
    %c0_6 = arith.constant 0 : index
    %c0_7 = arith.constant 0 : index
    %9 = vector.load %arg6[%c0_6, %c0_7] : memref<512x32xf32, #tpu.memory_space<vmem>>, vector<512x32xf32>
    tpu.vector_store %arg6[%c0_6, %c0_7], %8 {strides = array<i32>} : memref<512x32xf32, #tpu.memory_space<vmem>>, vector<512x32xf32>,
    %c0_8 = arith.constant 0 : index
    %c0_9 = arith.constant 0 : index
    %10 = vector.load %arg4[%c0_8, %c0_9] : memref<32x48xf32, #tpu.memory_space<vmem>>, vector<32x48xf32>
    %cst_10 = arith.constant dense<0.000000e+00> : vector<512x48xf32>
    %11 = tpu.matmul %8, %10, %cst_10 {dimension_numbers = #tpu.dot_dimension_numbers<[1], [0], [0], [1], [0, 0, 1, 1], [], []>} : vector<512x32xf32>, vector<32x48xf32>, vector<512x48xf32> -> vector<512x48xf32>
    %c0_11 = arith.constant 0 : index
    %c0_12 = arith.constant 0 : index
    %12 = vector.load %arg5[%c0_11, %c0_12] : memref<1x48xf32, #tpu.memory_space<vmem>>, vector<1x48xf32>
    %13 = vector.broadcast %12 : vector<1x48xf32> to vector<512x48xf32>
    %14 = arith.addf %11, %13 : vector<512x48xf32>
    %15 = vector.extract_strided_slice %14 {offsets = [0, 0], sizes = [512, 16], strides = [1, 1]} : vector<512x48xf32> to vector<512x16xf32>
    %c0_13 = arith.constant 0 : index
    %c0_14 = arith.constant 0 : index
    %16 = vector.load %arg7[%c0_13, %c0_14] : memref<512x16xf32, #tpu.memory_space<vmem>>, vector<512x16xf32>
    tpu.vector_store %arg7[%c0_13, %c0_14], %15 {strides = array<i32>} : memref<512x16xf32, #tpu.memory_space<vmem>>, vector<512x16xf32>,
    %17 = vector.extract_strided_slice %14 {offsets = [0, 16], sizes = [512, 32], strides = [1, 1]} : vector<512x48xf32> to vector<512x32xf32>
    %c0_15 = arith.constant 0 : index
    %c0_16 = arith.constant 0 : index
    %18 = vector.load %arg9[%c0_15, %c0_16] : memref<512x32xf32, #tpu.memory_space<vmem>>, vector<512x32xf32>
    tpu.vector_store %arg9[%c0_15, %c0_16], %17 {strides = array<i32>} : memref<512x32xf32, #tpu.memory_space<vmem>>, vector<512x32xf32>,
    %c0_17 = arith.constant 0 : index
    %c0_18 = arith.constant 0 : index
    %19 = tpu.strided_load %arg9[%c0_17, %c0_18] {strides = array<i32: 4, 1>} : memref<512x32xf32, #tpu.memory_space<vmem>>, vector<128x32xf32>
    %c1 = arith.constant 1 : index
    %c0_19 = arith.constant 0 : index
    %20 = tpu.strided_load %arg9[%c1, %c0_19] {strides = array<i32: 4, 1>} : memref<512x32xf32, #tpu.memory_space<vmem>>, vector<128x32xf32>
    %c2 = arith.constant 2 : index
    %c0_20 = arith.constant 0 : index
    %21 = tpu.strided_load %arg9[%c2, %c0_20] {strides = array<i32: 4, 1>} : memref<512x32xf32, #tpu.memory_space<vmem>>, vector<128x32xf32>
    %c3 = arith.constant 3 : index
    %c0_21 = arith.constant 0 : index
    %22 = tpu.strided_load %arg9[%c3, %c0_21] {strides = array<i32: 4, 1>} : memref<512x32xf32, #tpu.memory_space<vmem>>, vector<128x32xf32>
    %23 = arith.maximumf %19, %20 : vector<128x32xf32>
    %24 = arith.maximumf %21, %22 : vector<128x32xf32>
    %25 = arith.maximumf %23, %24 : vector<128x32xf32>
    %c0_22 = arith.constant 0 : index
    %c0_23 = arith.constant 0 : index
    %26 = vector.load %arg8[%c0_22, %c0_23] : memref<128x32xf32, #tpu.memory_space<vmem>>, vector<128x32xf32>
    tpu.vector_store %arg8[%c0_22, %c0_23], %25 {strides = array<i32>} : memref<128x32xf32, #tpu.memory_space<vmem>>, vector<128x32xf32>,
    return
  }
  func.func @transform_0(%arg0: i32) -> (i32, i32) {
    %c0_i32 = arith.constant 0 : i32
    %c0_i32_0 = arith.constant 0 : i32
    return %arg0, %c0_i32 : i32, i32
  }
  func.func @transform_1(%arg0: i32) -> (i32, i32) {
    %c0_i32 = arith.constant 0 : i32
    %c0_i32_0 = arith.constant 0 : i32
    %c0_i32_1 = arith.constant 0 : i32
    return %c0_i32, %c0_i32_0 : i32, i32
  }
  func.func @transform_2(%arg0: i32) -> (i32, i32) {
    %c0_i32 = arith.constant 0 : i32
    %c0_i32_0 = arith.constant 0 : i32
    %c0_i32_1 = arith.constant 0 : i32
    return %c0_i32, %c0_i32_0 : i32, i32
  }
  func.func @transform_3(%arg0: i32) -> (i32, i32) {
    %c0_i32 = arith.constant 0 : i32
    %c0_i32_0 = arith.constant 0 : i32
    %c0_i32_1 = arith.constant 0 : i32
    return %c0_i32, %c0_i32_0 : i32, i32
  }
  func.func @transform_4(%arg0: i32) -> (i32, i32) {
    %c0_i32 = arith.constant 0 : i32
    %c0_i32_0 = arith.constant 0 : i32
    %c0_i32_1 = arith.constant 0 : i32
    return %c0_i32, %c0_i32_0 : i32, i32
  }
  func.func @transform_5(%arg0: i32) -> (i32, i32) {
    %c0_i32 = arith.constant 0 : i32
    %c0_i32_0 = arith.constant 0 : i32
    return %arg0, %c0_i32 : i32, i32
  }
  func.func @transform_6(%arg0: i32) -> (i32, i32) {
    %c0_i32 = arith.constant 0 : i32
    %c0_i32_0 = arith.constant 0 : i32
    return %arg0, %c0_i32 : i32, i32
  }
  func.func @transform_7(%arg0: i32) -> (i32, i32) {
    %c0_i32 = arith.constant 0 : i32
    %c0_i32_0 = arith.constant 0 : i32
    return %arg0, %c0_i32 : i32, i32
  }
}

</mosaic_0001>

<llo_original>
// kernel: tpu_custom_call.1
$region0: #{tpu_custom_call.1}
  #allocation0 [shape = 'u32[]', space=smem, size = 0x4, offset = 0x4, fixed_abs, tag = 'smem constant byte address 0x4 - core index']
  #allocation1 [shape = 'u32[72,128]{1,0:T(1,128)}', space=vmem, size = 0x9000, scoped, tag = 'internal scratch']
  #allocation2 [shape = 'f32[512,32]{1,0:T(8,128)}', space=vmem, size = 0x40000, scoped, tag = 'scratch operand']
  %s0 = inlined_call_operand.vmem [shape: f32[512,32], index: 0, kind: input, shape index: {}]
  %s1 = inlined_call_operand.vmem [shape: f32[32,32], index: 1, kind: input, shape index: {}]
  %s2 = inlined_call_operand.vmem [shape: f32[1,32], index: 2, kind: input, shape index: {}]
  %s3 = inlined_call_operand.vmem [shape: f32[32,48], index: 3, kind: input, shape index: {}]
  %s4 = inlined_call_operand.vmem [shape: f32[1,48], index: 4, kind: input, shape index: {}]
  %s5 = inlined_call_operand.vmem [shape: f32[512,32], index: 5, kind: output, shape index: {0}]
  %s6 = inlined_call_operand.vmem [shape: f32[512,16], index: 6, kind: output, shape index: {1}]
  %s7 = inlined_call_operand.vmem [shape: f32[128,32], index: 7, kind: output, shape index: {2}]
  %8 = xla_tuple %s5, %s6, %s7
  %s9 = sld [smem:[#allocation0]]
  $region46: #{tpu_custom_call.1} parent=0
    _
  %s11 = ssub.s32 1, %s9
  %s12 = scalar_select 0, %s11, %s9
  // Predicated region
  $region2: #{tpu_custom_call.1} parent=0 // pred_check
    _
  $region3: #{tpu_custom_call.1} parent=0 // pred_check_branch
    %14 = sbr.rel (0) target = $region5
  $region4: #{tpu_custom_call.1} parent=0 // pred_region
    _
  $region5: #{tpu_custom_call.1} parent=0 // pred_fallthru
    _
  // Predicated region
  $region6: #{tpu_custom_call.1} parent=0 // pred_check
    _
  $region7: #{tpu_custom_call.1} parent=0 // pred_check_branch
    %16 = sbr.rel (0) target = $region9
  $region8: #{tpu_custom_call.1} parent=0 // pred_region
    _
  $region9: #{tpu_custom_call.1} parent=0 // pred_fallthru
    _
  // Predicated region
  $region10: #{tpu_custom_call.1} parent=0 // pred_check
    _
  $region11: #{tpu_custom_call.1} parent=0 // pred_check_branch
    %18 = sbr.rel (0) target = $region13
  $region12: #{tpu_custom_call.1} parent=0 // pred_region
    _
  $region13: #{tpu_custom_call.1} parent=0 // pred_fallthru
    _
  // Predicated region
  $region14: #{tpu_custom_call.1} parent=0 // pred_check
    _
  $region15: #{tpu_custom_call.1} parent=0 // pred_check_branch
    %20 = sbr.rel (0) target = $region17
  $region16: #{tpu_custom_call.1} parent=0 // pred_region
    _
  $region17: #{tpu_custom_call.1} parent=0 // pred_fallthru
    _
  // Predicated region
  $region18: #{tpu_custom_call.1} parent=0 // pred_check
    _
  $region19: #{tpu_custom_call.1} parent=0 // pred_check_branch
    %22 = sbr.rel (0) target = $region21
  $region20: #{tpu_custom_call.1} parent=0 // pred_region
    _
  $region21: #{tpu_custom_call.1} parent=0 // pred_fallthru
    _
  %v23 = vld [vmem:[%s0] sm:$0xff]
  %v24 = vld [vmem:[%s0 + $0x8] sm:$0xff]
  %v25 = vld [vmem:[%s0 + $0x10] sm:$0xff]
  %v26 = vld [vmem:[%s0 + $0x18] sm:$0xff]
  %v27 = vld [vmem:[%s0 + $0x20] sm:$0xff]
  %v28 = vld [vmem:[%s0 + $0x28] sm:$0xff]
  %v29 = vld [vmem:[%s0 + $0x30] sm:$0xff]
  %v30 = vld [vmem:[%s0 + $0x38] sm:$0xff]
  %v31 = vld [vmem:[%s0 + $0x40] sm:$0xff]
  %v32 = vld [vmem:[%s0 + $0x48] sm:$0xff]
  %v33 = vld [vmem:[%s0 + $0x50] sm:$0xff]
  %v34 = vld [vmem:[%s0 + $0x58] sm:$0xff]
  %v35 = vld [vmem:[%s0 + $0x60] sm:$0xff]
  %v36 = vld [vmem:[%s0 + $0x68] sm:$0xff]
  %v37 = vld [vmem:[%s0 + $0x70] sm:$0xff]
  %v38 = vld [vmem:[%s0 + $0x78] sm:$0xff]
  %v39 = vld [vmem:[%s0 + $0x80] sm:$0xff]
  %v40 = vld [vmem:[%s0 + $0x88] sm:$0xff]
  %v41 = vld [vmem:[%s0 + $0x90] sm:$0xff]
  %v42 = vld [vmem:[%s0 + $0x98] sm:$0xff]
  %v43 = vld [vmem:[%s0 + $0xa0] sm:$0xff]
  %v44 = vld [vmem:[%s0 + $0xa8] sm:$0xff]
  %v45 = vld [vmem:[%s0 + $0xb0] sm:$0xff]
  %v46 = vld [vmem:[%s0 + $0xb8] sm:$0xff]
  %v47 = vld [vmem:[%s0 + $0xc0] sm:$0xff]
  %v48 = vld [vmem:[%s0 + $0xc8] sm:$0xff]
  %v49 = vld [vmem:[%s0 + $0xd0] sm:$0xff]
  %v50 = vld [vmem:[%s0 + $0xd8] sm:$0xff]
  %v51 = vld [vmem:[%s0 + $0xe0] sm:$0xff]
  %v52 = vld [vmem:[%s0 + $0xe8] sm:$0xff]
  %v53 = vld [vmem:[%s0 + $0xf0] sm:$0xff]
  %v54 = vld [vmem:[%s0 + $0xf8] sm:$0xff]
  %v55 = vld [vmem:[%s0 + $0x100] sm:$0xff]
  %v56 = vld [vmem:[%s0 + $0x108] sm:$0xff]
  %v57 = vld [vmem:[%s0 + $0x110] sm:$0xff]
  %v58 = vld [vmem:[%s0 + $0x118] sm:$0xff]
  %v59 = vld [vmem:[%s0 + $0x120] sm:$0xff]
  %v60 = vld [vmem:[%s0 + $0x128] sm:$0xff]
  %v61 = vld [vmem:[%s0 + $0x130] sm:$0xff]
  %v62 = vld [vmem:[%s0 + $0x138] sm:$0xff]
  %v63 = vld [vmem:[%s0 + $0x140] sm:$0xff]
  %v64 = vld [vmem:[%s0 + $0x148] sm:$0xff]
  %v65 = vld [vmem:[%s0 + $0x150] sm:$0xff]
  %v66 = vld [vmem:[%s0 + $0x158] sm:$0xff]
  %v67 = vld [vmem:[%s0 + $0x160] sm:$0xff]
  %v68 = vld [vmem:[%s0 + $0x168] sm:$0xff]
  %v69 = vld [vmem:[%s0 + $0x170] sm:$0xff]
  %v70 = vld [vmem:[%s0 + $0x178] sm:$0xff]
  %v71 = vld [vmem:[%s0 + $0x180] sm:$0xff]
  %v72 = vld [vmem:[%s0 + $0x188] sm:$0xff]
  %v73 = vld [vmem:[%s0 + $0x190] sm:$0xff]
  %v74 = vld [vmem:[%s0 + $0x198] sm:$0xff]
  %v75 = vld [vmem:[%s0 + $0x1a0] sm:$0xff]
  %v76 = vld [vmem:[%s0 + $0x1a8] sm:$0xff]
  %v77 = vld [vmem:[%s0 + $0x1b0] sm:$0xff]
  %v78 = vld [vmem:[%s0 + $0x1b8] sm:$0xff]
  %v79 = vld [vmem:[%s0 + $0x1c0] sm:$0xff]
  %v80 = vld [vmem:[%s0 + $0x1c8] sm:$0xff]
  %v81 = vld [vmem:[%s0 + $0x1d0] sm:$0xff]
  %v82 = vld [vmem:[%s0 + $0x1d8] sm:$0xff]
  %v83 = vld [vmem:[%s0 + $0x1e0] sm:$0xff]
  %v84 = vld [vmem:[%s0 + $0x1e8] sm:$0xff]
  %v85 = vld [vmem:[%s0 + $0x1f0] sm:$0xff]
  %v86 = vld [vmem:[%s0 + $0x1f8] sm:$0xff]
  %v87 = vld [vmem:[%s1] sm:$0xff]
  %v88 = vld [vmem:[%s1 + $0x8] sm:$0xff]
  %v89 = vld [vmem:[%s1 + $0x10] sm:$0xff]
  %v90 = vld [vmem:[%s1 + $0x18] sm:$0xff]
  %v91 = vld [vmem:[%s2] sm:$0x1]
  %v93 = vperm.slane %v91, 0
  %vm95 = vcmask 261120
  %v97 = vsel %vm95, %v23, 0
  %v100 = vsel %vm95, %v24, 0
  %v103 = vsel %vm95, %v25, 0
  %v106 = vsel %vm95, %v26, 0
  %v109 = vsel %vm95, %v27, 0
  %v112 = vsel %vm95, %v28, 0
  %v115 = vsel %vm95, %v29, 0
  %v118 = vsel %vm95, %v30, 0
  %v121 = vsel %vm95, %v31, 0
  %v124 = vsel %vm95, %v32, 0
  %v127 = vsel %vm95, %v33, 0
  %v130 = vsel %vm95, %v34, 0
  %v133 = vsel %vm95, %v35, 0
  %v136 = vsel %vm95, %v36, 0
  %v139 = vsel %vm95, %v37, 0
  %v142 = vsel %vm95, %v38, 0
  %v145 = vsel %vm95, %v39, 0
  %v148 = vsel %vm95, %v40, 0
  %v151 = vsel %vm95, %v41, 0
  %v154 = vsel %vm95, %v42, 0
  %v157 = vsel %vm95, %v43, 0
  %v160 = vsel %vm95, %v44, 0
  %v163 = vsel %vm95, %v45, 0
  %v166 = vsel %vm95, %v46, 0
  %v169 = vsel %vm95, %v47, 0
  %v172 = vsel %vm95, %v48, 0
  %v175 = vsel %vm95, %v49, 0
  %v178 = vsel %vm95, %v50, 0
  %v181 = vsel %vm95, %v51, 0
  %v184 = vsel %vm95, %v52, 0
  %v187 = vsel %vm95, %v53, 0
  %v190 = vsel %vm95, %v54, 0
  %v193 = vsel %vm95, %v55, 0
  %v196 = vsel %vm95, %v56, 0
  %v199 = vsel %vm95, %v57, 0
  %v202 = vsel %vm95, %v58, 0
  %v205 = vsel %vm95, %v59, 0
  %v208 = vsel %vm95, %v60, 0
  %v211 = vsel %vm95, %v61, 0
  %v214 = vsel %vm95, %v62, 0
  %v217 = vsel %vm95, %v63, 0
  %v220 = vsel %vm95, %v64, 0
  %v223 = vsel %vm95, %v65, 0
  %v226 = vsel %vm95, %v66, 0
  %v229 = vsel %vm95, %v67, 0
  %v232 = vsel %vm95, %v68, 0
  %v235 = vsel %vm95, %v69, 0
  %v238 = vsel %vm95, %v70, 0
  %v241 = vsel %vm95, %v71, 0
  %v244 = vsel %vm95, %v72, 0
  %v247 = vsel %vm95, %v73, 0
  %v250 = vsel %vm95, %v74, 0
  %v253 = vsel %vm95, %v75, 0
  %v256 = vsel %vm95, %v76, 0
  %v259 = vsel %vm95, %v77, 0
  %v262 = vsel %vm95, %v78, 0
  %v265 = vsel %vm95, %v79, 0
  %v268 = vsel %vm95, %v80, 0
  %v271 = vsel %vm95, %v81, 0
  %v274 = vsel %vm95, %v82, 0
  %v277 = vsel %vm95, %v83, 0
  %v280 = vsel %vm95, %v84, 0
  %v283 = vsel %vm95, %v85, 0
  %v286 = vsel %vm95, %v86, 0
  %288 = vmatpush.msra.mxu0 0.0
  %289 = vmatpush.msra.mxu0 0.0
  %290 = vmatpush.msra.mxu0 0.0
  %291 = vmatpush.msra.mxu0 0.0
  %292 = vmatpush.msra.mxu0 0.0
  %293 = vmatpush.msra.mxu0 0.0
  %294 = vmatpush.msra.mxu0 0.0
  %295 = vmatpush.msra.mxu0 0.0
  %296 = vmatpush.msra.mxu0 0.0
  %297 = vmatpush.msra.mxu0 0.0
  %298 = vmatpush.msra.mxu0 0.0
  %299 = vmatpush.msra.mxu0 0.0
  %300 = vmatpush.msra.mxu0 %v90
  %301 = vmatpush.msra.mxu0 %v89
  %302 = vmatpush.msra.mxu0 %v88
  %303 = vmatpush.msra.mxu0 %v87
  %304 = vmatmul.f32.gmra.mxu0 %v97
  %v305 = vpop.f32.mrf.mxu0
  %v306 = vadd.f32 %v93, %v305
  %307 = vmatmul.f32.gmra.mxu0 %v100
  %v308 = vpop.f32.mrf.mxu0
  %v309 = vadd.f32 %v93, %v308
  %310 = vmatmul.f32.gmra.mxu0 %v103
  %v311 = vpop.f32.mrf.mxu0
  %v312 = vadd.f32 %v93, %v311
  %313 = vmatmul.f32.gmra.mxu0 %v106
  %v314 = vpop.f32.mrf.mxu0
  %v315 = vadd.f32 %v93, %v314
  %316 = vmatmul.f32.gmra.mxu0 %v109
  %v317 = vpop.f32.mrf.mxu0
  %v318 = vadd.f32 %v93, %v317
  %319 = vmatmul.f32.gmra.mxu0 %v112
  %v320 = vpop.f32.mrf.mxu0
  %v321 = vadd.f32 %v93, %v320
  %322 = vmatmul.f32.gmra.mxu0 %v115
  %v323 = vpop.f32.mrf.mxu0
  %v324 = vadd.f32 %v93, %v323
  %325 = vmatmul.f32.gmra.mxu0 %v118
  %v326 = vpop.f32.mrf.mxu0
  %v327 = vadd.f32 %v93, %v326
  %328 = vmatmul.f32.gmra.mxu0 %v121
  %v329 = vpop.f32.mrf.mxu0
  %v330 = vadd.f32 %v93, %v329
  %331 = vmatmul.f32.gmra.mxu0 %v124
  %v332 = vpop.f32.mrf.mxu0
  %v333 = vadd.f32 %v93, %v332
  %334 = vmatmul.f32.gmra.mxu0 %v127
  %v335 = vpop.f32.mrf.mxu0
  %v336 = vadd.f32 %v93, %v335
  %337 = vmatmul.f32.gmra.mxu0 %v130
  %v338 = vpop.f32.mrf.mxu0
  %v339 = vadd.f32 %v93, %v338
  %340 = vmatmul.f32.gmra.mxu0 %v133
  %v341 = vpop.f32.mrf.mxu0
  %v342 = vadd.f32 %v93, %v341
  %343 = vmatmul.f32.gmra.mxu0 %v136
  %v344 = vpop.f32.mrf.mxu0
  %v345 = vadd.f32 %v93, %v344
  %346 = vmatmul.f32.gmra.mxu0 %v139
  %v347 = vpop.f32.mrf.mxu0
  %v348 = vadd.f32 %v93, %v347
  %349 = vmatmul.f32.gmra.mxu0 %v142
  %v350 = vpop.f32.mrf.mxu0
  %v351 = vadd.f32 %v93, %v350
  %352 = vmatmul.f32.gmra.mxu0 %v145
  %v353 = vpop.f32.mrf.mxu0
  %v354 = vadd.f32 %v93, %v353
  %355 = vmatmul.f32.gmra.mxu0 %v148
  %v356 = vpop.f32.mrf.mxu0
  %v357 = vadd.f32 %v93, %v356
  %358 = vmatmul.f32.gmra.mxu0 %v151
  %v359 = vpop.f32.mrf.mxu0
  %v360 = vadd.f32 %v93, %v359
  %361 = vmatmul.f32.gmra.mxu0 %v154
  %v362 = vpop.f32.mrf.mxu0
  %v363 = vadd.f32 %v93, %v362
  %364 = vmatmul.f32.gmra.mxu0 %v157
  %v365 = vpop.f32.mrf.mxu0
  %v366 = vadd.f32 %v93, %v365
  %367 = vmatmul.f32.gmra.mxu0 %v160
  %v368 = vpop.f32.mrf.mxu0
  %v369 = vadd.f32 %v93, %v368
  %370 = vmatmul.f32.gmra.mxu0 %v163
  %v371 = vpop.f32.mrf.mxu0
  %v372 = vadd.f32 %v93, %v371
  %373 = vmatmul.f32.gmra.mxu0 %v166
  %v374 = vpop.f32.mrf.mxu0
  %v375 = vadd.f32 %v93, %v374
  %376 = vmatmul.f32.gmra.mxu0 %v169
  %v377 = vpop.f32.mrf.mxu0
  %v378 = vadd.f32 %v93, %v377
  %379 = vmatmul.f32.gmra.mxu0 %v172
  %v380 = vpop.f32.mrf.mxu0
  %v381 = vadd.f32 %v93, %v380
  %382 = vmatmul.f32.gmra.mxu0 %v175
  %v383 = vpop.f32.mrf.mxu0
  %v384 = vadd.f32 %v93, %v383
  %385 = vmatmul.f32.gmra.mxu0 %v178
  %v386 = vpop.f32.mrf.mxu0
  %v387 = vadd.f32 %v93, %v386
  %388 = vmatmul.f32.gmra.mxu0 %v181
  %v389 = vpop.f32.mrf.mxu0
  %v390 = vadd.f32 %v93, %v389
  %391 = vmatmul.f32.gmra.mxu0 %v184
  %v392 = vpop.f32.mrf.mxu0
  %v393 = vadd.f32 %v93, %v392
  %394 = vmatmul.f32.gmra.mxu0 %v187
  %v395 = vpop.f32.mrf.mxu0
  %v396 = vadd.f32 %v93, %v395
  %397 = vmatmul.f32.gmra.mxu0 %v190
  %v398 = vpop.f32.mrf.mxu0
  %v399 = vadd.f32 %v93, %v398
  %400 = vmatmul.f32.gmra.mxu0 %v193
  %v401 = vpop.f32.mrf.mxu0
  %v402 = vadd.f32 %v93, %v401
  %403 = vmatmul.f32.gmra.mxu0 %v196
  %v404 = vpop.f32.mrf.mxu0
  %v405 = vadd.f32 %v93, %v404
  %406 = vmatmul.f32.gmra.mxu0 %v199
  %v407 = vpop.f32.mrf.mxu0
  %v408 = vadd.f32 %v93, %v407
  %409 = vmatmul.f32.gmra.mxu0 %v202
  %v410 = vpop.f32.mrf.mxu0
  %v411 = vadd.f32 %v93, %v410
  %412 = vmatmul.f32.gmra.mxu0 %v205
  %v413 = vpop.f32.mrf.mxu0
  %v414 = vadd.f32 %v93, %v413
  %415 = vmatmul.f32.gmra.mxu0 %v208
  %v416 = vpop.f32.mrf.mxu0
  %v417 = vadd.f32 %v93, %v416
  %418 = vmatmul.f32.gmra.mxu0 %v211
  %v419 = vpop.f32.mrf.mxu0
  %v420 = vadd.f32 %v93, %v419
  %421 = vmatmul.f32.gmra.mxu0 %v214
  %v422 = vpop.f32.mrf.mxu0
  %v423 = vadd.f32 %v93, %v422
  %424 = vmatmul.f32.gmra.mxu0 %v217
  %v425 = vpop.f32.mrf.mxu0
  %v426 = vadd.f32 %v93, %v425
  %427 = vmatmul.f32.gmra.mxu0 %v220
  %v428 = vpop.f32.mrf.mxu0
  %v429 = vadd.f32 %v93, %v428
  %430 = vmatmul.f32.gmra.mxu0 %v223
  %v431 = vpop.f32.mrf.mxu0
  %v432 = vadd.f32 %v93, %v431
  %433 = vmatmul.f32.gmra.mxu0 %v226
  %v434 = vpop.f32.mrf.mxu0
  %v435 = vadd.f32 %v93, %v434
  %436 = vmatmul.f32.gmra.mxu0 %v229
  %v437 = vpop.f32.mrf.mxu0
  %v438 = vadd.f32 %v93, %v437
  %439 = vmatmul.f32.gmra.mxu0 %v232
  %v440 = vpop.f32.mrf.mxu0
  %v441 = vadd.f32 %v93, %v440
  %442 = vmatmul.f32.gmra.mxu0 %v235
  %v443 = vpop.f32.mrf.mxu0
  %v444 = vadd.f32 %v93, %v443
  %445 = vmatmul.f32.gmra.mxu0 %v238
  %v446 = vpop.f32.mrf.mxu0
  %v447 = vadd.f32 %v93, %v446
  %448 = vmatmul.f32.gmra.mxu0 %v241
  %v449 = vpop.f32.mrf.mxu0
  %v450 = vadd.f32 %v93, %v449
  %451 = vmatmul.f32.gmra.mxu0 %v244
  %v452 = vpop.f32.mrf.mxu0
  %v453 = vadd.f32 %v93, %v452
  %454 = vmatmul.f32.gmra.mxu0 %v247
  %v455 = vpop.f32.mrf.mxu0
  %v456 = vadd.f32 %v93, %v455
  %457 = vmatmul.f32.gmra.mxu0 %v250
  %v458 = vpop.f32.mrf.mxu0
  %v459 = vadd.f32 %v93, %v458
  %460 = vmatmul.f32.gmra.mxu0 %v253
  %v461 = vpop.f32.mrf.mxu0
  %v462 = vadd.f32 %v93, %v461
  %463 = vmatmul.f32.gmra.mxu0 %v256
  %v464 = vpop.f32.mrf.mxu0
  %v465 = vadd.f32 %v93, %v464
  %466 = vmatmul.f32.gmra.mxu0 %v259
  %v467 = vpop.f32.mrf.mxu0
  %v468 = vadd.f32 %v93, %v467
  %469 = vmatmul.f32.gmra.mxu0 %v262
  %v470 = vpop.f32.mrf.mxu0
  %v471 = vadd.f32 %v93, %v470
  %472 = vmatmul.f32.gmra.mxu0 %v265
  %v473 = vpop.f32.mrf.mxu0
  %v474 = vadd.f32 %v93, %v473
  %475 = vmatmul.f32.gmra.mxu0 %v268
  %v476 = vpop.f32.mrf.mxu0
  %v477 = vadd.f32 %v93, %v476
  %478 = vmatmul.f32.gmra.mxu0 %v271
  %v479 = vpop.f32.mrf.mxu0
  %v480 = vadd.f32 %v93, %v479
  %481 = vmatmul.f32.gmra.mxu0 %v274
  %v482 = vpop.f32.mrf.mxu0
  %v483 = vadd.f32 %v93, %v482
  %484 = vmatmul.f32.gmra.mxu0 %v277
  %v485 = vpop.f32.mrf.mxu0
  %v486 = vadd.f32 %v93, %v485
  %487 = vmatmul.f32.gmra.mxu0 %v280
  %v488 = vpop.f32.mrf.mxu0
  %v489 = vadd.f32 %v93, %v488
  %490 = vmatmul.f32.gmra.mxu0 %v283
  %v491 = vpop.f32.mrf.mxu0
  %v492 = vadd.f32 %v93, %v491
  %493 = vmatmul.f32.gmra.mxu0 %v286
  %v494 = vpop.f32.mrf.mxu0
  %v495 = vadd.f32 %v93, %v494
  %496 = vdwg.mxu0
  %v497 = vadd.f32 %v306, %v23
  %v498 = vadd.f32 %v309, %v24
  %v499 = vadd.f32 %v312, %v25
  %v500 = vadd.f32 %v315, %v26
  %v501 = vadd.f32 %v318, %v27
  %v502 = vadd.f32 %v321, %v28
  %v503 = vadd.f32 %v324, %v29
  %v504 = vadd.f32 %v327, %v30
  %v505 = vadd.f32 %v330, %v31
  %v506 = vadd.f32 %v333, %v32
  %v507 = vadd.f32 %v336, %v33
  %v508 = vadd.f32 %v339, %v34
  %v509 = vadd.f32 %v342, %v35
  %v510 = vadd.f32 %v345, %v36
  %v511 = vadd.f32 %v348, %v37
  %v512 = vadd.f32 %v351, %v38
  %v513 = vadd.f32 %v354, %v39
  %v514 = vadd.f32 %v357, %v40
  %v515 = vadd.f32 %v360, %v41
  %v516 = vadd.f32 %v363, %v42
  %v517 = vadd.f32 %v366, %v43
  %v518 = vadd.f32 %v369, %v44
  %v519 = vadd.f32 %v372, %v45
  %v520 = vadd.f32 %v375, %v46
  %v521 = vadd.f32 %v378, %v47
  %v522 = vadd.f32 %v381, %v48
  %v523 = vadd.f32 %v384, %v49
  %v524 = vadd.f32 %v387, %v50
  %v525 = vadd.f32 %v390, %v51
  %v526 = vadd.f32 %v393, %v52
  %v527 = vadd.f32 %v396, %v53
  %v528 = vadd.f32 %v399, %v54
  %v529 = vadd.f32 %v402, %v55
  %v530 = vadd.f32 %v405, %v56
  %v531 = vadd.f32 %v408, %v57
  %v532 = vadd.f32 %v411, %v58
  %v533 = vadd.f32 %v414, %v59
  %v534 = vadd.f32 %v417, %v60
  %v535 = vadd.f32 %v420, %v61
  %v536 = vadd.f32 %v423, %v62
  %v537 = vadd.f32 %v426, %v63
  %v538 = vadd.f32 %v429, %v64
  %v539 = vadd.f32 %v432, %v65
  %v540 = vadd.f32 %v435, %v66
  %v541 = vadd.f32 %v438, %v67
  %v542 = vadd.f32 %v441, %v68
  %v543 = vadd.f32 %v444, %v69
  %v544 = vadd.f32 %v447, %v70
  %v545 = vadd.f32 %v450, %v71
  %v546 = vadd.f32 %v453, %v72
  %v547 = vadd.f32 %v456, %v73
  %v548 = vadd.f32 %v459, %v74
  %v549 = vadd.f32 %v462, %v75
  %v550 = vadd.f32 %v465, %v76
  %v551 = vadd.f32 %v468, %v77
  %v552 = vadd.f32 %v471, %v78
  %v553 = vadd.f32 %v474, %v79
  %v554 = vadd.f32 %v477, %v80
  %v555 = vadd.f32 %v480, %v81
  %v556 = vadd.f32 %v483, %v82
  %v557 = vadd.f32 %v486, %v83
  %v558 = vadd.f32 %v489, %v84
  %v559 = vadd.f32 %v492, %v85
  %v560 = vadd.f32 %v495, %v86
  %v561 = vmax.f32 %v497, 0.0
  %v562 = vmax.f32 %v498, 0.0
  %v563 = vmax.f32 %v499, 0.0
  %v564 = vmax.f32 %v500, 0.0
  %v565 = vmax.f32 %v501, 0.0
  %v566 = vmax.f32 %v502, 0.0
  %v567 = vmax.f32 %v503, 0.0
  %v568 = vmax.f32 %v504, 0.0
  %v569 = vmax.f32 %v505, 0.0
  %v570 = vmax.f32 %v506, 0.0
  %v571 = vmax.f32 %v507, 0.0
  %v572 = vmax.f32 %v508, 0.0
  %v573 = vmax.f32 %v509, 0.0
  %v574 = vmax.f32 %v510, 0.0
  %v575 = vmax.f32 %v511, 0.0
  %v576 = vmax.f32 %v512, 0.0
  %v577 = vmax.f32 %v513, 0.0
  %v578 = vmax.f32 %v514, 0.0
  %v579 = vmax.f32 %v515, 0.0
  %v580 = vmax.f32 %v516, 0.0
  %v581 = vmax.f32 %v517, 0.0
  %v582 = vmax.f32 %v518, 0.0
  %v583 = vmax.f32 %v519, 0.0
  %v584 = vmax.f32 %v520, 0.0
  %v585 = vmax.f32 %v521, 0.0
  %v586 = vmax.f32 %v522, 0.0
  %v587 = vmax.f32 %v523, 0.0
  %v588 = vmax.f32 %v524, 0.0
  %v589 = vmax.f32 %v525, 0.0
  %v590 = vmax.f32 %v526, 0.0
  %v591 = vmax.f32 %v527, 0.0
  %v592 = vmax.f32 %v528, 0.0
  %v593 = vmax.f32 %v529, 0.0
  %v594 = vmax.f32 %v530, 0.0
  %v595 = vmax.f32 %v531, 0.0
  %v596 = vmax.f32 %v532, 0.0
  %v597 = vmax.f32 %v533, 0.0
  %v598 = vmax.f32 %v534, 0.0
  %v599 = vmax.f32 %v535, 0.0
  %v600 = vmax.f32 %v536, 0.0
  %v601 = vmax.f32 %v537, 0.0
  %v602 = vmax.f32 %v538, 0.0
  %v603 = vmax.f32 %v539, 0.0
  %v604 = vmax.f32 %v540, 0.0
  %v605 = vmax.f32 %v541, 0.0
  %v606 = vmax.f32 %v542, 0.0
  %v607 = vmax.f32 %v543, 0.0
  %v608 = vmax.f32 %v544, 0.0
  %v609 = vmax.f32 %v545, 0.0
  %v610 = vmax.f32 %v546, 0.0
  %v611 = vmax.f32 %v547, 0.0
  %v612 = vmax.f32 %v548, 0.0
  %v613 = vmax.f32 %v549, 0.0
  %v614 = vmax.f32 %v550, 0.0
  %v615 = vmax.f32 %v551, 0.0
  %v616 = vmax.f32 %v552, 0.0
  %v617 = vmax.f32 %v553, 0.0
  %v618 = vmax.f32 %v554, 0.0
  %v619 = vmax.f32 %v555, 0.0
  %v620 = vmax.f32 %v556, 0.0
  %v621 = vmax.f32 %v557, 0.0
  %v622 = vmax.f32 %v558, 0.0
  %v623 = vmax.f32 %v559, 0.0
  %v624 = vmax.f32 %v560, 0.0
  %625 = vst.msk [vmem:[%s5] sm:$0xff] %vm95, %v561
  %626 = vst.msk [vmem:[%s5 + $0x8] sm:$0xff] %vm95, %v562
  %627 = vst.msk [vmem:[%s5 + $0x10] sm:$0xff] %vm95, %v563
  %628 = vst.msk [vmem:[%s5 + $0x18] sm:$0xff] %vm95, %v564
  %629 = vst.msk [vmem:[%s5 + $0x20] sm:$0xff] %vm95, %v565
  %630 = vst.msk [vmem:[%s5 + $0x28] sm:$0xff] %vm95, %v566
  %631 = vst.msk [vmem:[%s5 + $0x30] sm:$0xff] %vm95, %v567
  %632 = vst.msk [vmem:[%s5 + $0x38] sm:$0xff] %vm95, %v568
  %633 = vst.msk [vmem:[%s5 + $0x40] sm:$0xff] %vm95, %v569
  %634 = vst.msk [vmem:[%s5 + $0x48] sm:$0xff] %vm95, %v570
  %635 = vst.msk [vmem:[%s5 + $0x50] sm:$0xff] %vm95, %v571
  %636 = vst.msk [vmem:[%s5 + $0x58] sm:$0xff] %vm95, %v572
  %637 = vst.msk [vmem:[%s5 + $0x60] sm:$0xff] %vm95, %v573
  %638 = vst.msk [vmem:[%s5 + $0x68] sm:$0xff] %vm95, %v574
  %639 = vst.msk [vmem:[%s5 + $0x70] sm:$0xff] %vm95, %v575
  %640 = vst.msk [vmem:[%s5 + $0x78] sm:$0xff] %vm95, %v576
  %641 = vst.msk [vmem:[%s5 + $0x80] sm:$0xff] %vm95, %v577
  %642 = vst.msk [vmem:[%s5 + $0x88] sm:$0xff] %vm95, %v578
  %643 = vst.msk [vmem:[%s5 + $0x90] sm:$0xff] %vm95, %v579
  %644 = vst.msk [vmem:[%s5 + $0x98] sm:$0xff] %vm95, %v580
  %645 = vst.msk [vmem:[%s5 + $0xa0] sm:$0xff] %vm95, %v581
  %646 = vst.msk [vmem:[%s5 + $0xa8] sm:$0xff] %vm95, %v582
  %647 = vst.msk [vmem:[%s5 + $0xb0] sm:$0xff] %vm95, %v583
  %648 = vst.msk [vmem:[%s5 + $0xb8] sm:$0xff] %vm95, %v584
  %649 = vst.msk [vmem:[%s5 + $0xc0] sm:$0xff] %vm95, %v585
  %650 = vst.msk [vmem:[%s5 + $0xc8] sm:$0xff] %vm95, %v586
  %651 = vst.msk [vmem:[%s5 + $0xd0] sm:$0xff] %vm95, %v587
  %652 = vst.msk [vmem:[%s5 + $0xd8] sm:$0xff] %vm95, %v588
  %653 = vst.msk [vmem:[%s5 + $0xe0] sm:$0xff] %vm95, %v589
  %654 = vst.msk [vmem:[%s5 + $0xe8] sm:$0xff] %vm95, %v590
  %655 = vst.msk [vmem:[%s5 + $0xf0] sm:$0xff] %vm95, %v591
  %656 = vst.msk [vmem:[%s5 + $0xf8] sm:$0xff] %vm95, %v592
  %657 = vst.msk [vmem:[%s5 + $0x100] sm:$0xff] %vm95, %v593
  %658 = vst.msk [vmem:[%s5 + $0x108] sm:$0xff] %vm95, %v594
  %659 = vst.msk [vmem:[%s5 + $0x110] sm:$0xff] %vm95, %v595
  %660 = vst.msk [vmem:[%s5 + $0x118] sm:$0xff] %vm95, %v596
  %661 = vst.msk [vmem:[%s5 + $0x120] sm:$0xff] %vm95, %v597
  %662 = vst.msk [vmem:[%s5 + $0x128] sm:$0xff] %vm95, %v598
  %663 = vst.msk [vmem:[%s5 + $0x130] sm:$0xff] %vm95, %v599
  %664 = vst.msk [vmem:[%s5 + $0x138] sm:$0xff] %vm95, %v600
  %665 = vst.msk [vmem:[%s5 + $0x140] sm:$0xff] %vm95, %v601
  %666 = vst.msk [vmem:[%s5 + $0x148] sm:$0xff] %vm95, %v602
  %667 = vst.msk [vmem:[%s5 + $0x150] sm:$0xff] %vm95, %v603
  %668 = vst.msk [vmem:[%s5 + $0x158] sm:$0xff] %vm95, %v604
  %669 = vst.msk [vmem:[%s5 + $0x160] sm:$0xff] %vm95, %v605
  %670 = vst.msk [vmem:[%s5 + $0x168] sm:$0xff] %vm95, %v606
  %671 = vst.msk [vmem:[%s5 + $0x170] sm:$0xff] %vm95, %v607
  %672 = vst.msk [vmem:[%s5 + $0x178] sm:$0xff] %vm95, %v608
  %673 = vst.msk [vmem:[%s5 + $0x180] sm:$0xff] %vm95, %v609
  %674 = vst.msk [vmem:[%s5 + $0x188] sm:$0xff] %vm95, %v610
  %675 = vst.msk [vmem:[%s5 + $0x190] sm:$0xff] %vm95, %v611
  %676 = vst.msk [vmem:[%s5 + $0x198] sm:$0xff] %vm95, %v612
  %677 = vst.msk [vmem:[%s5 + $0x1a0] sm:$0xff] %vm95, %v613
  %678 = vst.msk [vmem:[%s5 + $0x1a8] sm:$0xff] %vm95, %v614
  %679 = vst.msk [vmem:[%s5 + $0x1b0] sm:$0xff] %vm95, %v615
  %680 = vst.msk [vmem:[%s5 + $0x1b8] sm:$0xff] %vm95, %v616
  %681 = vst.msk [vmem:[%s5 + $0x1c0] sm:$0xff] %vm95, %v617
  %682 = vst.msk [vmem:[%s5 + $0x1c8] sm:$0xff] %vm95, %v618
  %683 = vst.msk [vmem:[%s5 + $0x1d0] sm:$0xff] %vm95, %v619
  %684 = vst.msk [vmem:[%s5 + $0x1d8] sm:$0xff] %vm95, %v620
  %685 = vst.msk [vmem:[%s5 + $0x1e0] sm:$0xff] %vm95, %v621
  %686 = vst.msk [vmem:[%s5 + $0x1e8] sm:$0xff] %vm95, %v622
  %687 = vst.msk [vmem:[%s5 + $0x1f0] sm:$0xff] %vm95, %v623
  %688 = vst.msk [vmem:[%s5 + $0x1f8] sm:$0xff] %vm95, %v624
  %v689 = vld [vmem:[%s3] sm:$0xff]
  %v690 = vld [vmem:[%s3 + $0x8] sm:$0xff]
  %v691 = vld [vmem:[%s3 + $0x10] sm:$0xff]
  %v692 = vld [vmem:[%s3 + $0x18] sm:$0xff]
  %v693 = vld [vmem:[%s4] sm:$0x1]
  %v695 = vperm.slane %v693, 0
  %v698 = vsel %vm95, %v561, 0
  %v701 = vsel %vm95, %v562, 0
  %v704 = vsel %vm95, %v563, 0
  %v707 = vsel %vm95, %v564, 0
  %v710 = vsel %vm95, %v565, 0
  %v713 = vsel %vm95, %v566, 0
  %v716 = vsel %vm95, %v567, 0
  %v719 = vsel %vm95, %v568, 0
  %v722 = vsel %vm95, %v569, 0
  %v725 = vsel %vm95, %v570, 0
  %v728 = vsel %vm95, %v571, 0
  %v731 = vsel %vm95, %v572, 0
  %v734 = vsel %vm95, %v573, 0
  %v737 = vsel %vm95, %v574, 0
  %v740 = vsel %vm95, %v575, 0
  %v743 = vsel %vm95, %v576, 0
  %v746 = vsel %vm95, %v577, 0
  %v749 = vsel %vm95, %v578, 0
  %v752 = vsel %vm95, %v579, 0
  %v755 = vsel %vm95, %v580, 0
  %v758 = vsel %vm95, %v581, 0
  %v761 = vsel %vm95, %v582, 0
  %v764 = vsel %vm95, %v583, 0
  %v767 = vsel %vm95, %v584, 0
  %v770 = vsel %vm95, %v585, 0
  %v773 = vsel %vm95, %v586, 0
  %v776 = vsel %vm95, %v587, 0
  %v779 = vsel %vm95, %v588, 0
  %v782 = vsel %vm95, %v589, 0
  %v785 = vsel %vm95, %v590, 0
  %v788 = vsel %vm95, %v591, 0
  %v791 = vsel %vm95, %v592, 0
  %v794 = vsel %vm95, %v593, 0
  %v797 = vsel %vm95, %v594, 0
  %v800 = vsel %vm95, %v595, 0
  %v803 = vsel %vm95, %v596, 0
  %v806 = vsel %vm95, %v597, 0
  %v809 = vsel %vm95, %v598, 0
  %v812 = vsel %vm95, %v599, 0
  %v815 = vsel %vm95, %v600, 0
  %v818 = vsel %vm95, %v601, 0
  %v821 = vsel %vm95, %v602, 0
  %v824 = vsel %vm95, %v603, 0
  %v827 = vsel %vm95, %v604, 0
  %v830 = vsel %vm95, %v605, 0
  %v833 = vsel %vm95, %v606, 0
  %v836 = vsel %vm95, %v607, 0
  %v839 = vsel %vm95, %v608, 0
  %v842 = vsel %vm95, %v609, 0
  %v845 = vsel %vm95, %v610, 0
  %v848 = vsel %vm95, %v611, 0
  %v851 = vsel %vm95, %v612, 0
  %v854 = vsel %vm95, %v613, 0
  %v857 = vsel %vm95, %v614, 0
  %v860 = vsel %vm95, %v615, 0
  %v863 = vsel %vm95, %v616, 0
  %v866 = vsel %vm95, %v617, 0
  %v869 = vsel %vm95, %v618, 0
  %v872 = vsel %vm95, %v619, 0
  %v875 = vsel %vm95, %v620, 0
  %v878 = vsel %vm95, %v621, 0
  %v881 = vsel %vm95, %v622, 0
  %v884 = vsel %vm95, %v623, 0
  %v887 = vsel %vm95, %v624, 0
  %889 = vmatpush.msra.mxu0 0.0
  %890 = vmatpush.msra.mxu0 0.0
  %891 = vmatpush.msra.mxu0 0.0
  %892 = vmatpush.msra.mxu0 0.0
  %893 = vmatpush.msra.mxu0 0.0
  %894 = vmatpush.msra.mxu0 0.0
  %895 = vmatpush.msra.mxu0 0.0
  %896 = vmatpush.msra.mxu0 0.0
  %897 = vmatpush.msra.mxu0 0.0
  %898 = vmatpush.msra.mxu0 0.0
  %899 = vmatpush.msra.mxu0 0.0
  %900 = vmatpush.msra.mxu0 0.0
  %901 = vmatpush.msra.mxu0 %v692
  %902 = vmatpush.msra.mxu0 %v691
  %903 = vmatpush.msra.mxu0 %v690
  %904 = vmatpush.msra.mxu0 %v689
  %905 = vmatmul.f32.gmra.mxu0 %v698
  %v906 = vpop.f32.mrf.mxu0
  %v907 = vadd.f32 %v695, %v906
  %908 = vmatmul.f32.gmra.mxu0 %v701
  %v909 = vpop.f32.mrf.mxu0
  %v910 = vadd.f32 %v695, %v909
  %911 = vmatmul.f32.gmra.mxu0 %v704
  %v912 = vpop.f32.mrf.mxu0
  %v913 = vadd.f32 %v695, %v912
  %914 = vmatmul.f32.gmra.mxu0 %v707
  %v915 = vpop.f32.mrf.mxu0
  %v916 = vadd.f32 %v695, %v915
  %917 = vmatmul.f32.gmra.mxu0 %v710
  %v918 = vpop.f32.mrf.mxu0
  %v919 = vadd.f32 %v695, %v918
  %920 = vmatmul.f32.gmra.mxu0 %v713
  %v921 = vpop.f32.mrf.mxu0
  %v922 = vadd.f32 %v695, %v921
  %923 = vmatmul.f32.gmra.mxu0 %v716
  %v924 = vpop.f32.mrf.mxu0
  %v925 = vadd.f32 %v695, %v924
  %926 = vmatmul.f32.gmra.mxu0 %v719
  %v927 = vpop.f32.mrf.mxu0
  %v928 = vadd.f32 %v695, %v927
  %929 = vmatmul.f32.gmra.mxu0 %v722
  %v930 = vpop.f32.mrf.mxu0
  %v931 = vadd.f32 %v695, %v930
  %932 = vmatmul.f32.gmra.mxu0 %v725
  %v933 = vpop.f32.mrf.mxu0
  %v934 = vadd.f32 %v695, %v933
  %935 = vmatmul.f32.gmra.mxu0 %v728
  %v936 = vpop.f32.mrf.mxu0
  %v937 = vadd.f32 %v695, %v936
  %938 = vmatmul.f32.gmra.mxu0 %v731
  %v939 = vpop.f32.mrf.mxu0
  %v940 = vadd.f32 %v695, %v939
  %941 = vmatmul.f32.gmra.mxu0 %v734
  %v942 = vpop.f32.mrf.mxu0
  %v943 = vadd.f32 %v695, %v942
  %944 = vmatmul.f32.gmra.mxu0 %v737
  %v945 = vpop.f32.mrf.mxu0
  %v946 = vadd.f32 %v695, %v945
  %947 = vmatmul.f32.gmra.mxu0 %v740
  %v948 = vpop.f32.mrf.mxu0
  %v949 = vadd.f32 %v695, %v948
  %950 = vmatmul.f32.gmra.mxu0 %v743
  %v951 = vpop.f32.mrf.mxu0
  %v952 = vadd.f32 %v695, %v951
  %953 = vmatmul.f32.gmra.mxu0 %v746
  %v954 = vpop.f32.mrf.mxu0
  %v955 = vadd.f32 %v695, %v954
  %956 = vmatmul.f32.gmra.mxu0 %v749
  %v957 = vpop.f32.mrf.mxu0
  %v958 = vadd.f32 %v695, %v957
  %959 = vmatmul.f32.gmra.mxu0 %v752
  %v960 = vpop.f32.mrf.mxu0
  %v961 = vadd.f32 %v695, %v960
  %962 = vmatmul.f32.gmra.mxu0 %v755
  %v963 = vpop.f32.mrf.mxu0
  %v964 = vadd.f32 %v695, %v963
  %965 = vmatmul.f32.gmra.mxu0 %v758
  %v966 = vpop.f32.mrf.mxu0
  %v967 = vadd.f32 %v695, %v966
  %968 = vmatmul.f32.gmra.mxu0 %v761
  %v969 = vpop.f32.mrf.mxu0
  %v970 = vadd.f32 %v695, %v969
  %971 = vmatmul.f32.gmra.mxu0 %v764
  %v972 = vpop.f32.mrf.mxu0
  %v973 = vadd.f32 %v695, %v972
  %974 = vmatmul.f32.gmra.mxu0 %v767
  %v975 = vpop.f32.mrf.mxu0
  %v976 = vadd.f32 %v695, %v975
  %977 = vmatmul.f32.gmra.mxu0 %v770
  %v978 = vpop.f32.mrf.mxu0
  %v979 = vadd.f32 %v695, %v978
  %980 = vmatmul.f32.gmra.mxu0 %v773
  %v981 = vpop.f32.mrf.mxu0
  %v982 = vadd.f32 %v695, %v981
  %983 = vmatmul.f32.gmra.mxu0 %v776
  %v984 = vpop.f32.mrf.mxu0
  %v985 = vadd.f32 %v695, %v984
  %986 = vmatmul.f32.gmra.mxu0 %v779
  %v987 = vpop.f32.mrf.mxu0
  %v988 = vadd.f32 %v695, %v987
  %989 = vmatmul.f32.gmra.mxu0 %v782
  %v990 = vpop.f32.mrf.mxu0
  %v991 = vadd.f32 %v695, %v990
  %992 = vmatmul.f32.gmra.mxu0 %v785
  %v993 = vpop.f32.mrf.mxu0
  %v994 = vadd.f32 %v695, %v993
  %995 = vmatmul.f32.gmra.mxu0 %v788
  %v996 = vpop.f32.mrf.mxu0
  %v997 = vadd.f32 %v695, %v996
  %998 = vmatmul.f32.gmra.mxu0 %v791
  %v999 = vpop.f32.mrf.mxu0
  %v1000 = vadd.f32 %v695, %v999
  %1001 = vmatmul.f32.gmra.mxu0 %v794
  %v1002 = vpop.f32.mrf.mxu0
  %v1003 = vadd.f32 %v695, %v1002
  %1004 = vmatmul.f32.gmra.mxu0 %v797
  %v1005 = vpop.f32.mrf.mxu0
  %v1006 = vadd.f32 %v695, %v1005
  %1007 = vmatmul.f32.gmra.mxu0 %v800
  %v1008 = vpop.f32.mrf.mxu0
  %v1009 = vadd.f32 %v695, %v1008
  %1010 = vmatmul.f32.gmra.mxu0 %v803
  %v1011 = vpop.f32.mrf.mxu0
  %v1012 = vadd.f32 %v695, %v1011
  %1013 = vmatmul.f32.gmra.mxu0 %v806
  %v1014 = vpop.f32.mrf.mxu0
  %v1015 = vadd.f32 %v695, %v1014
  %1016 = vmatmul.f32.gmra.mxu0 %v809
  %v1017 = vpop.f32.mrf.mxu0
  %v1018 = vadd.f32 %v695, %v1017
  %1019 = vmatmul.f32.gmra.mxu0 %v812
  %v1020 = vpop.f32.mrf.mxu0
  %v1021 = vadd.f32 %v695, %v1020
  %1022 = vmatmul.f32.gmra.mxu0 %v815
  %v1023 = vpop.f32.mrf.mxu0
  %v1024 = vadd.f32 %v695, %v1023
  %1025 = vmatmul.f32.gmra.mxu0 %v818
  %v1026 = vpop.f32.mrf.mxu0
  %v1027 = vadd.f32 %v695, %v1026
  %1028 = vmatmul.f32.gmra.mxu0 %v821
  %v1029 = vpop.f32.mrf.mxu0
  %v1030 = vadd.f32 %v695, %v1029
  %1031 = vmatmul.f32.gmra.mxu0 %v824
  %v1032 = vpop.f32.mrf.mxu0
  %v1033 = vadd.f32 %v695, %v1032
  %1034 = vmatmul.f32.gmra.mxu0 %v827
  %v1035 = vpop.f32.mrf.mxu0
  %v1036 = vadd.f32 %v695, %v1035
  %1037 = vmatmul.f32.gmra.mxu0 %v830
  %v1038 = vpop.f32.mrf.mxu0
  %v1039 = vadd.f32 %v695, %v1038
  %1040 = vmatmul.f32.gmra.mxu0 %v833
  %v1041 = vpop.f32.mrf.mxu0
  %v1042 = vadd.f32 %v695, %v1041
  %1043 = vmatmul.f32.gmra.mxu0 %v836
  %v1044 = vpop.f32.mrf.mxu0
  %v1045 = vadd.f32 %v695, %v1044
  %1046 = vmatmul.f32.gmra.mxu0 %v839
  %v1047 = vpop.f32.mrf.mxu0
  %v1048 = vadd.f32 %v695, %v1047
  %1049 = vmatmul.f32.gmra.mxu0 %v842
  %v1050 = vpop.f32.mrf.mxu0
  %v1051 = vadd.f32 %v695, %v1050
  %1052 = vmatmul.f32.gmra.mxu0 %v845
  %v1053 = vpop.f32.mrf.mxu0
  %v1054 = vadd.f32 %v695, %v1053
  %1055 = vmatmul.f32.gmra.mxu0 %v848
  %v1056 = vpop.f32.mrf.mxu0
  %v1057 = vadd.f32 %v695, %v1056
  %1058 = vmatmul.f32.gmra.mxu0 %v851
  %v1059 = vpop.f32.mrf.mxu0
  %v1060 = vadd.f32 %v695, %v1059
  %1061 = vmatmul.f32.gmra.mxu0 %v854
  %v1062 = vpop.f32.mrf.mxu0
  %v1063 = vadd.f32 %v695, %v1062
  %1064 = vmatmul.f32.gmra.mxu0 %v857
  %v1065 = vpop.f32.mrf.mxu0
  %v1066 = vadd.f32 %v695, %v1065
  %1067 = vmatmul.f32.gmra.mxu0 %v860
  %v1068 = vpop.f32.mrf.mxu0
  %v1069 = vadd.f32 %v695, %v1068
  %1070 = vmatmul.f32.gmra.mxu0 %v863
  %v1071 = vpop.f32.mrf.mxu0
  %v1072 = vadd.f32 %v695, %v1071
  %1073 = vmatmul.f32.gmra.mxu0 %v866
  %v1074 = vpop.f32.mrf.mxu0
  %v1075 = vadd.f32 %v695, %v1074
  %1076 = vmatmul.f32.gmra.mxu0 %v869
  %v1077 = vpop.f32.mrf.mxu0
  %v1078 = vadd.f32 %v695, %v1077
  %1079 = vmatmul.f32.gmra.mxu0 %v872
  %v1080 = vpop.f32.mrf.mxu0
  %v1081 = vadd.f32 %v695, %v1080
  %1082 = vmatmul.f32.gmra.mxu0 %v875
  %v1083 = vpop.f32.mrf.mxu0
  %v1084 = vadd.f32 %v695, %v1083
  %1085 = vmatmul.f32.gmra.mxu0 %v878
  %v1086 = vpop.f32.mrf.mxu0
  %v1087 = vadd.f32 %v695, %v1086
  %1088 = vmatmul.f32.gmra.mxu0 %v881
  %v1089 = vpop.f32.mrf.mxu0
  %v1090 = vadd.f32 %v695, %v1089
  %1091 = vmatmul.f32.gmra.mxu0 %v884
  %v1092 = vpop.f32.mrf.mxu0
  %v1093 = vadd.f32 %v695, %v1092
  %1094 = vmatmul.f32.gmra.mxu0 %v887
  %v1095 = vpop.f32.mrf.mxu0
  %v1096 = vadd.f32 %v695, %v1095
  %1097 = vdwg.mxu0
  %vm1098 = vcmask 130048
  %1099 = vst.msk [vmem:[%s6] sm:$0xff] %vm1098, %v907
  %1100 = vst.msk [vmem:[%s6 + $0x8] sm:$0xff] %vm1098, %v910
  %1101 = vst.msk [vmem:[%s6 + $0x10] sm:$0xff] %vm1098, %v913
  %1102 = vst.msk [vmem:[%s6 + $0x18] sm:$0xff] %vm1098, %v916
  %1103 = vst.msk [vmem:[%s6 + $0x20] sm:$0xff] %vm1098, %v919
  %1104 = vst.msk [vmem:[%s6 + $0x28] sm:$0xff] %vm1098, %v922
  %1105 = vst.msk [vmem:[%s6 + $0x30] sm:$0xff] %vm1098, %v925
  %1106 = vst.msk [vmem:[%s6 + $0x38] sm:$0xff] %vm1098, %v928
  %1107 = vst.msk [vmem:[%s6 + $0x40] sm:$0xff] %vm1098, %v931
  %1108 = vst.msk [vmem:[%s6 + $0x48] sm:$0xff] %vm1098, %v934
  %1109 = vst.msk [vmem:[%s6 + $0x50] sm:$0xff] %vm1098, %v937
  %1110 = vst.msk [vmem:[%s6 + $0x58] sm:$0xff] %vm1098, %v940
  %1111 = vst.msk [vmem:[%s6 + $0x60] sm:$0xff] %vm1098, %v943
  %1112 = vst.msk [vmem:[%s6 + $0x68] sm:$0xff] %vm1098, %v946
  %1113 = vst.msk [vmem:[%s6 + $0x70] sm:$0xff] %vm1098, %v949
  %1114 = vst.msk [vmem:[%s6 + $0x78] sm:$0xff] %vm1098, %v952
  %1115 = vst.msk [vmem:[%s6 + $0x80] sm:$0xff] %vm1098, %v955
  %1116 = vst.msk [vmem:[%s6 + $0x88] sm:$0xff] %vm1098, %v958
  %1117 = vst.msk [vmem:[%s6 + $0x90] sm:$0xff] %vm1098, %v961
  %1118 = vst.msk [vmem:[%s6 + $0x98] sm:$0xff] %vm1098, %v964
  %1119 = vst.msk [vmem:[%s6 + $0xa0] sm:$0xff] %vm1098, %v967
  %1120 = vst.msk [vmem:[%s6 + $0xa8] sm:$0xff] %vm1098, %v970
  %1121 = vst.msk [vmem:[%s6 + $0xb0] sm:$0xff] %vm1098, %v973
  %1122 = vst.msk [vmem:[%s6 + $0xb8] sm:$0xff] %vm1098, %v976
  %1123 = vst.msk [vmem:[%s6 + $0xc0] sm:$0xff] %vm1098, %v979
  %1124 = vst.msk [vmem:[%s6 + $0xc8] sm:$0xff] %vm1098, %v982
  %1125 = vst.msk [vmem:[%s6 + $0xd0] sm:$0xff] %vm1098, %v985
  %1126 = vst.msk [vmem:[%s6 + $0xd8] sm:$0xff] %vm1098, %v988
  %1127 = vst.msk [vmem:[%s6 + $0xe0] sm:$0xff] %vm1098, %v991
  %1128 = vst.msk [vmem:[%s6 + $0xe8] sm:$0xff] %vm1098, %v994
  %1129 = vst.msk [vmem:[%s6 + $0xf0] sm:$0xff] %vm1098, %v997
  %1130 = vst.msk [vmem:[%s6 + $0xf8] sm:$0xff] %vm1098, %v1000
  %1131 = vst.msk [vmem:[%s6 + $0x100] sm:$0xff] %vm1098, %v1003
  %1132 = vst.msk [vmem:[%s6 + $0x108] sm:$0xff] %vm1098, %v1006
  %1133 = vst.msk [vmem:[%s6 + $0x110] sm:$0xff] %vm1098, %v1009
  %1134 = vst.msk [vmem:[%s6 + $0x118] sm:$0xff] %vm1098, %v1012
  %1135 = vst.msk [vmem:[%s6 + $0x120] sm:$0xff] %vm1098, %v1015
  %1136 = vst.msk [vmem:[%s6 + $0x128] sm:$0xff] %vm1098, %v1018
  %1137 = vst.msk [vmem:[%s6 + $0x130] sm:$0xff] %vm1098, %v1021
  %1138 = vst.msk [vmem:[%s6 + $0x138] sm:$0xff] %vm1098, %v1024
  %1139 = vst.msk [vmem:[%s6 + $0x140] sm:$0xff] %vm1098, %v1027
  %1140 = vst.msk [vmem:[%s6 + $0x148] sm:$0xff] %vm1098, %v1030
  %1141 = vst.msk [vmem:[%s6 + $0x150] sm:$0xff] %vm1098, %v1033
  %1142 = vst.msk [vmem:[%s6 + $0x158] sm:$0xff] %vm1098, %v1036
  %1143 = vst.msk [vmem:[%s6 + $0x160] sm:$0xff] %vm1098, %v1039
  %1144 = vst.msk [vmem:[%s6 + $0x168] sm:$0xff] %vm1098, %v1042
  %1145 = vst.msk [vmem:[%s6 + $0x170] sm:$0xff] %vm1098, %v1045
  %1146 = vst.msk [vmem:[%s6 + $0x178] sm:$0xff] %vm1098, %v1048
  %1147 = vst.msk [vmem:[%s6 + $0x180] sm:$0xff] %vm1098, %v1051
  %1148 = vst.msk [vmem:[%s6 + $0x188] sm:$0xff] %vm1098, %v1054
  %1149 = vst.msk [vmem:[%s6 + $0x190] sm:$0xff] %vm1098, %v1057
  %1150 = vst.msk [vmem:[%s6 + $0x198] sm:$0xff] %vm1098, %v1060
  %1151 = vst.msk [vmem:[%s6 + $0x1a0] sm:$0xff] %vm1098, %v1063
  %1152 = vst.msk [vmem:[%s6 + $0x1a8] sm:$0xff] %vm1098, %v1066
  %1153 = vst.msk [vmem:[%s6 + $0x1b0] sm:$0xff] %vm1098, %v1069
  %1154 = vst.msk [vmem:[%s6 + $0x1b8] sm:$0xff] %vm1098, %v1072
  %1155 = vst.msk [vmem:[%s6 + $0x1c0] sm:$0xff] %vm1098, %v1075
  %1156 = vst.msk [vmem:[%s6 + $0x1c8] sm:$0xff] %vm1098, %v1078
  %1157 = vst.msk [vmem:[%s6 + $0x1d0] sm:$0xff] %vm1098, %v1081
  %1158 = vst.msk [vmem:[%s6 + $0x1d8] sm:$0xff] %vm1098, %v1084
  %1159 = vst.msk [vmem:[%s6 + $0x1e0] sm:$0xff] %vm1098, %v1087
  %1160 = vst.msk [vmem:[%s6 + $0x1e8] sm:$0xff] %vm1098, %v1090
  %1161 = vst.msk [vmem:[%s6 + $0x1f0] sm:$0xff] %vm1098, %v1093
  %1162 = vst.msk [vmem:[%s6 + $0x1f8] sm:$0xff] %vm1098, %v1096
  %1227 = vrot.lane.b32.xlu0 %v907, 112
  %v1228 = vpop.permute.xlu0 %1227
  %1229 = vrot.lane.b32.xlu0 %v910, 112
  %v1230 = vpop.permute.xlu0 %1229
  %1231 = vrot.lane.b32.xlu0 %v913, 112
  %v1232 = vpop.permute.xlu0 %1231
  %1233 = vrot.lane.b32.xlu0 %v916, 112
  %v1234 = vpop.permute.xlu0 %1233
  %1235 = vrot.lane.b32.xlu0 %v919, 112
  %v1236 = vpop.permute.xlu0 %1235
  %1237 = vrot.lane.b32.xlu0 %v922, 112
  %v1238 = vpop.permute.xlu0 %1237
  %1239 = vrot.lane.b32.xlu0 %v925, 112
  %v1240 = vpop.permute.xlu0 %1239
  %1241 = vrot.lane.b32.xlu0 %v928, 112
  %v1242 = vpop.permute.xlu0 %1241
  %1243 = vrot.lane.b32.xlu0 %v931, 112
  %v1244 = vpop.permute.xlu0 %1243
  %1245 = vrot.lane.b32.xlu0 %v934, 112
  %v1246 = vpop.permute.xlu0 %1245
  %1247 = vrot.lane.b32.xlu0 %v937, 112
  %v1248 = vpop.permute.xlu0 %1247
  %1249 = vrot.lane.b32.xlu0 %v940, 112
  %v1250 = vpop.permute.xlu0 %1249
  %1251 = vrot.lane.b32.xlu0 %v943, 112
  %v1252 = vpop.permute.xlu0 %1251
  %1253 = vrot.lane.b32.xlu0 %v946, 112
  %v1254 = vpop.permute.xlu0 %1253
  %1255 = vrot.lane.b32.xlu0 %v949, 112
  %v1256 = vpop.permute.xlu0 %1255
  %1257 = vrot.lane.b32.xlu0 %v952, 112
  %v1258 = vpop.permute.xlu0 %1257
  %1259 = vrot.lane.b32.xlu0 %v955, 112
  %v1260 = vpop.permute.xlu0 %1259
  %1261 = vrot.lane.b32.xlu0 %v958, 112
  %v1262 = vpop.permute.xlu0 %1261
  %1263 = vrot.lane.b32.xlu0 %v961, 112
  %v1264 = vpop.permute.xlu0 %1263
  %1265 = vrot.lane.b32.xlu0 %v964, 112
  %v1266 = vpop.permute.xlu0 %1265
  %1267 = vrot.lane.b32.xlu0 %v967, 112
  %v1268 = vpop.permute.xlu0 %1267
  %1269 = vrot.lane.b32.xlu0 %v970, 112
  %v1270 = vpop.permute.xlu0 %1269
  %1271 = vrot.lane.b32.xlu0 %v973, 112
  %v1272 = vpop.permute.xlu0 %1271
  %1273 = vrot.lane.b32.xlu0 %v976, 112
  %v1274 = vpop.permute.xlu0 %1273
  %1275 = vrot.lane.b32.xlu0 %v979, 112
  %v1276 = vpop.permute.xlu0 %1275
  %1277 = vrot.lane.b32.xlu0 %v982, 112
  %v1278 = vpop.permute.xlu0 %1277
  %1279 = vrot.lane.b32.xlu0 %v985, 112
  %v1280 = vpop.permute.xlu0 %1279
  %1281 = vrot.lane.b32.xlu0 %v988, 112
  %v1282 = vpop.permute.xlu0 %1281
  %1283 = vrot.lane.b32.xlu0 %v991, 112
  %v1284 = vpop.permute.xlu0 %1283
  %1285 = vrot.lane.b32.xlu0 %v994, 112
  %v1286 = vpop.permute.xlu0 %1285
  %1287 = vrot.lane.b32.xlu0 %v997, 112
  %v1288 = vpop.permute.xlu0 %1287
  %1289 = vrot.lane.b32.xlu0 %v1000, 112
  %v1290 = vpop.permute.xlu0 %1289
  %1291 = vrot.lane.b32.xlu0 %v1003, 112
  %v1292 = vpop.permute.xlu0 %1291
  %1293 = vrot.lane.b32.xlu0 %v1006, 112
  %v1294 = vpop.permute.xlu0 %1293
  %1295 = vrot.lane.b32.xlu0 %v1009, 112
  %v1296 = vpop.permute.xlu0 %1295
  %1297 = vrot.lane.b32.xlu0 %v1012, 112
  %v1298 = vpop.permute.xlu0 %1297
  %1299 = vrot.lane.b32.xlu0 %v1015, 112
  %v1300 = vpop.permute.xlu0 %1299
  %1301 = vrot.lane.b32.xlu0 %v1018, 112
  %v1302 = vpop.permute.xlu0 %1301
  %1303 = vrot.lane.b32.xlu0 %v1021, 112
  %v1304 = vpop.permute.xlu0 %1303
  %1305 = vrot.lane.b32.xlu0 %v1024, 112
  %v1306 = vpop.permute.xlu0 %1305
  %1307 = vrot.lane.b32.xlu0 %v1027, 112
  %v1308 = vpop.permute.xlu0 %1307
  %1309 = vrot.lane.b32.xlu0 %v1030, 112
  %v1310 = vpop.permute.xlu0 %1309
  %1311 = vrot.lane.b32.xlu0 %v1033, 112
  %v1312 = vpop.permute.xlu0 %1311
  %1313 = vrot.lane.b32.xlu0 %v1036, 112
  %v1314 = vpop.permute.xlu0 %1313
  %1315 = vrot.lane.b32.xlu0 %v1039, 112
  %v1316 = vpop.permute.xlu0 %1315
  %1317 = vrot.lane.b32.xlu0 %v1042, 112
  %v1318 = vpop.permute.xlu0 %1317
  %1319 = vrot.lane.b32.xlu0 %v1045, 112
  %v1320 = vpop.permute.xlu0 %1319
  %1321 = vrot.lane.b32.xlu0 %v1048, 112
  %v1322 = vpop.permute.xlu0 %1321
  %1323 = vrot.lane.b32.xlu0 %v1051, 112
  %v1324 = vpop.permute.xlu0 %1323
  %1325 = vrot.lane.b32.xlu0 %v1054, 112
  %v1326 = vpop.permute.xlu0 %1325
  %1327 = vrot.lane.b32.xlu0 %v1057, 112
  %v1328 = vpop.permute.xlu0 %1327
  %1329 = vrot.lane.b32.xlu0 %v1060, 112
  %v1330 = vpop.permute.xlu0 %1329
  %1331 = vrot.lane.b32.xlu0 %v1063, 112
  %v1332 = vpop.permute.xlu0 %1331
  %1333 = vrot.lane.b32.xlu0 %v1066, 112
  %v1334 = vpop.permute.xlu0 %1333
  %1335 = vrot.lane.b32.xlu0 %v1069, 112
  %v1336 = vpop.permute.xlu0 %1335
  %1337 = vrot.lane.b32.xlu0 %v1072, 112
  %v1338 = vpop.permute.xlu0 %1337
  %1339 = vrot.lane.b32.xlu0 %v1075, 112
  %v1340 = vpop.permute.xlu0 %1339
  %1341 = vrot.lane.b32.xlu0 %v1078, 112
  %v1342 = vpop.permute.xlu0 %1341
  %1343 = vrot.lane.b32.xlu0 %v1081, 112
  %v1344 = vpop.permute.xlu0 %1343
  %1345 = vrot.lane.b32.xlu0 %v1084, 112
  %v1346 = vpop.permute.xlu0 %1345
  %1347 = vrot.lane.b32.xlu0 %v1087, 112
  %v1348 = vpop.permute.xlu0 %1347
  %1349 = vrot.lane.b32.xlu0 %v1090, 112
  %v1350 = vpop.permute.xlu0 %1349
  %1351 = vrot.lane.b32.xlu0 %v1093, 112
  %v1352 = vpop.permute.xlu0 %1351
  %1353 = vrot.lane.b32.xlu0 %v1096, 112
  %v1354 = vpop.permute.xlu0 %1353
  %1419 = vst.msk [vmem:[#allocation2] sm:$0xff] %vm95, %v1228
  %1420 = vst.msk [vmem:[#allocation2 + $0x8] sm:$0xff] %vm95, %v1230
  %1421 = vst.msk [vmem:[#allocation2 + $0x10] sm:$0xff] %vm95, %v1232
  %1422 = vst.msk [vmem:[#allocation2 + $0x18] sm:$0xff] %vm95, %v1234
  %1423 = vst.msk [vmem:[#allocation2 + $0x20] sm:$0xff] %vm95, %v1236
  %1424 = vst.msk [vmem:[#allocation2 + $0x28] sm:$0xff] %vm95, %v1238
  %1425 = vst.msk [vmem:[#allocation2 + $0x30] sm:$0xff] %vm95, %v1240
  %1426 = vst.msk [vmem:[#allocation2 + $0x38] sm:$0xff] %vm95, %v1242
  %1427 = vst.msk [vmem:[#allocation2 + $0x40] sm:$0xff] %vm95, %v1244
  %1428 = vst.msk [vmem:[#allocation2 + $0x48] sm:$0xff] %vm95, %v1246
  %1429 = vst.msk [vmem:[#allocation2 + $0x50] sm:$0xff] %vm95, %v1248
  %1430 = vst.msk [vmem:[#allocation2 + $0x58] sm:$0xff] %vm95, %v1250
  %1431 = vst.msk [vmem:[#allocation2 + $0x60] sm:$0xff] %vm95, %v1252
  %1432 = vst.msk [vmem:[#allocation2 + $0x68] sm:$0xff] %vm95, %v1254
  %1433 = vst.msk [vmem:[#allocation2 + $0x70] sm:$0xff] %vm95, %v1256
  %1434 = vst.msk [vmem:[#allocation2 + $0x78] sm:$0xff] %vm95, %v1258
  %1435 = vst.msk [vmem:[#allocation2 + $0x80] sm:$0xff] %vm95, %v1260
  %1436 = vst.msk [vmem:[#allocation2 + $0x88] sm:$0xff] %vm95, %v1262
  %1437 = vst.msk [vmem:[#allocation2 + $0x90] sm:$0xff] %vm95, %v1264
  %1438 = vst.msk [vmem:[#allocation2 + $0x98] sm:$0xff] %vm95, %v1266
  %1439 = vst.msk [vmem:[#allocation2 + $0xa0] sm:$0xff] %vm95, %v1268
  %1440 = vst.msk [vmem:[#allocation2 + $0xa8] sm:$0xff] %vm95, %v1270
  %1441 = vst.msk [vmem:[#allocation2 + $0xb0] sm:$0xff] %vm95, %v1272
  %1442 = vst.msk [vmem:[#allocation2 + $0xb8] sm:$0xff] %vm95, %v1274
  %1443 = vst.msk [vmem:[#allocation2 + $0xc0] sm:$0xff] %vm95, %v1276
  %1444 = vst.msk [vmem:[#allocation2 + $0xc8] sm:$0xff] %vm95, %v1278
  %1445 = vst.msk [vmem:[#allocation2 + $0xd0] sm:$0xff] %vm95, %v1280
  %1446 = vst.msk [vmem:[#allocation2 + $0xd8] sm:$0xff] %vm95, %v1282
  %1447 = vst.msk [vmem:[#allocation2 + $0xe0] sm:$0xff] %vm95, %v1284
  %1448 = vst.msk [vmem:[#allocation2 + $0xe8] sm:$0xff] %vm95, %v1286
  %1449 = vst.msk [vmem:[#allocation2 + $0xf0] sm:$0xff] %vm95, %v1288
  %1450 = vst.msk [vmem:[#allocation2 + $0xf8] sm:$0xff] %vm95, %v1290
  %1451 = vst.msk [vmem:[#allocation2 + $0x100] sm:$0xff] %vm95, %v1292
  %1452 = vst.msk [vmem:[#allocation2 + $0x108] sm:$0xff] %vm95, %v1294
  %1453 = vst.msk [vmem:[#allocation2 + $0x110] sm:$0xff] %vm95, %v1296
  %1454 = vst.msk [vmem:[#allocation2 + $0x118] sm:$0xff] %vm95, %v1298
  %1455 = vst.msk [vmem:[#allocation2 + $0x120] sm:$0xff] %vm95, %v1300
  %1456 = vst.msk [vmem:[#allocation2 + $0x128] sm:$0xff] %vm95, %v1302
  %1457 = vst.msk [vmem:[#allocation2 + $0x130] sm:$0xff] %vm95, %v1304
  %1458 = vst.msk [vmem:[#allocation2 + $0x138] sm:$0xff] %vm95, %v1306
  %1459 = vst.msk [vmem:[#allocation2 + $0x140] sm:$0xff] %vm95, %v1308
  %1460 = vst.msk [vmem:[#allocation2 + $0x148] sm:$0xff] %vm95, %v1310
  %1461 = vst.msk [vmem:[#allocation2 + $0x150] sm:$0xff] %vm95, %v1312
  %1462 = vst.msk [vmem:[#allocation2 + $0x158] sm:$0xff] %vm95, %v1314
  %1463 = vst.msk [vmem:[#allocation2 + $0x160] sm:$0xff] %vm95, %v1316
  %1464 = vst.msk [vmem:[#allocation2 + $0x168] sm:$0xff] %vm95, %v1318
  %1465 = vst.msk [vmem:[#allocation2 + $0x170] sm:$0xff] %vm95, %v1320
  %1466 = vst.msk [vmem:[#allocation2 + $0x178] sm:$0xff] %vm95, %v1322
  %1467 = vst.msk [vmem:[#allocation2 + $0x180] sm:$0xff] %vm95, %v1324
  %1468 = vst.msk [vmem:[#allocation2 + $0x188] sm:$0xff] %vm95, %v1326
  %1469 = vst.msk [vmem:[#allocation2 + $0x190] sm:$0xff] %vm95, %v1328
  %1470 = vst.msk [vmem:[#allocation2 + $0x198] sm:$0xff] %vm95, %v1330
  %1471 = vst.msk [vmem:[#allocation2 + $0x1a0] sm:$0xff] %vm95, %v1332
  %1472 = vst.msk [vmem:[#allocation2 + $0x1a8] sm:$0xff] %vm95, %v1334
  %1473 = vst.msk [vmem:[#allocation2 + $0x1b0] sm:$0xff] %vm95, %v1336
  %1474 = vst.msk [vmem:[#allocation2 + $0x1b8] sm:$0xff] %vm95, %v1338
  %1475 = vst.msk [vmem:[#allocation2 + $0x1c0] sm:$0xff] %vm95, %v1340
  %1476 = vst.msk [vmem:[#allocation2 + $0x1c8] sm:$0xff] %vm95, %v1342
  %1477 = vst.msk [vmem:[#allocation2 + $0x1d0] sm:$0xff] %vm95, %v1344
  %1478 = vst.msk [vmem:[#allocation2 + $0x1d8] sm:$0xff] %vm95, %v1346
  %1479 = vst.msk [vmem:[#allocation2 + $0x1e0] sm:$0xff] %vm95, %v1348
  %1480 = vst.msk [vmem:[#allocation2 + $0x1e8] sm:$0xff] %vm95, %v1350
  %1481 = vst.msk [vmem:[#allocation2 + $0x1f0] sm:$0xff] %vm95, %v1352
  %1482 = vst.msk [vmem:[#allocation2 + $0x1f8] sm:$0xff] %vm95, %v1354
  %v1483 = vld [vmem:[#allocation2] ss:$4 sm:$0xff]
  %s1484 = scalar_lea.vmem [#allocation2], 32
  %v1485 = vld [vmem:[%s1484] ss:$4 sm:$0xff]
  %s1486 = scalar_lea.vmem [#allocation2], 64
  %v1487 = vld [vmem:[%s1486] ss:$4 sm:$0xff]
  %s1488 = scalar_lea.vmem [#allocation2], 96
  %v1489 = vld [vmem:[%s1488] ss:$4 sm:$0xff]
  %s1490 = scalar_lea.vmem [#allocation2], 128
  %v1491 = vld [vmem:[%s1490] ss:$4 sm:$0xff]
  %s1492 = scalar_lea.vmem [#allocation2], 160
  %v1493 = vld [vmem:[%s1492] ss:$4 sm:$0xff]
  %s1494 = scalar_lea.vmem [#allocation2], 192
  %v1495 = vld [vmem:[%s1494] ss:$4 sm:$0xff]
  %s1496 = scalar_lea.vmem [#allocation2], 224
  %v1497 = vld [vmem:[%s1496] ss:$4 sm:$0xff]
  %s1498 = scalar_lea.vmem [#allocation2], 256
  %v1499 = vld [vmem:[%s1498] ss:$4 sm:$0xff]
  %s1500 = scalar_lea.vmem [#allocation2], 288
  %v1501 = vld [vmem:[%s1500] ss:$4 sm:$0xff]
  %s1502 = scalar_lea.vmem [#allocation2], 320
  %v1503 = vld [vmem:[%s1502] ss:$4 sm:$0xff]
  %s1504 = scalar_lea.vmem [#allocation2], 352
  %v1505 = vld [vmem:[%s1504] ss:$4 sm:$0xff]
  %s1506 = scalar_lea.vmem [#allocation2], 384
  %v1507 = vld [vmem:[%s1506] ss:$4 sm:$0xff]
  %s1508 = scalar_lea.vmem [#allocation2], 416
  %v1509 = vld [vmem:[%s1508] ss:$4 sm:$0xff]
  %s1510 = scalar_lea.vmem [#allocation2], 448
  %v1511 = vld [vmem:[%s1510] ss:$4 sm:$0xff]
  %s1512 = scalar_lea.vmem [#allocation2], 480
  %v1513 = vld [vmem:[%s1512] ss:$4 sm:$0xff]
  %s1514 = scalar_lea.vmem [#allocation2], 1
  %v1515 = vld [vmem:[%s1514] ss:$4 sm:$0xff]
  %s1516 = scalar_lea.vmem [#allocation2], 33
  %v1517 = vld [vmem:[%s1516] ss:$4 sm:$0xff]
  %s1518 = scalar_lea.vmem [#allocation2], 65
  %v1519 = vld [vmem:[%s1518] ss:$4 sm:$0xff]
  %s1520 = scalar_lea.vmem [#allocation2], 97
  %v1521 = vld [vmem:[%s1520] ss:$4 sm:$0xff]
  %s1522 = scalar_lea.vmem [#allocation2], 129
  %v1523 = vld [vmem:[%s1522] ss:$4 sm:$0xff]
  %s1524 = scalar_lea.vmem [#allocation2], 161
  %v1525 = vld [vmem:[%s1524] ss:$4 sm:$0xff]
  %s1526 = scalar_lea.vmem [#allocation2], 193
  %v1527 = vld [vmem:[%s1526] ss:$4 sm:$0xff]
  %s1528 = scalar_lea.vmem [#allocation2], 225
  %v1529 = vld [vmem:[%s1528] ss:$4 sm:$0xff]
  %s1530 = scalar_lea.vmem [#allocation2], 257
  %v1531 = vld [vmem:[%s1530] ss:$4 sm:$0xff]
  %s1532 = scalar_lea.vmem [#allocation2], 289
  %v1533 = vld [vmem:[%s1532] ss:$4 sm:$0xff]
  %s1534 = scalar_lea.vmem [#allocation2], 321
  %v1535 = vld [vmem:[%s1534] ss:$4 sm:$0xff]
  %s1536 = scalar_lea.vmem [#allocation2], 353
  %v1537 = vld [vmem:[%s1536] ss:$4 sm:$0xff]
  %s1538 = scalar_lea.vmem [#allocation2], 385
  %v1539 = vld [vmem:[%s1538] ss:$4 sm:$0xff]
  %s1540 = scalar_lea.vmem [#allocation2], 417
  %v1541 = vld [vmem:[%s1540] ss:$4 sm:$0xff]
  %s1542 = scalar_lea.vmem [#allocation2], 449
  %v1543 = vld [vmem:[%s1542] ss:$4 sm:$0xff]
  %s1544 = scalar_lea.vmem [#allocation2], 481
  %v1545 = vld [vmem:[%s1544] ss:$4 sm:$0xff]
  %s1546 = scalar_lea.vmem [#allocation2], 2
  %v1547 = vld [vmem:[%s1546] ss:$4 sm:$0xff]
  %s1548 = scalar_lea.vmem [#allocation2], 34
  %v1549 = vld [vmem:[%s1548] ss:$4 sm:$0xff]
  %s1550 = scalar_lea.vmem [#allocation2], 66
  %v1551 = vld [vmem:[%s1550] ss:$4 sm:$0xff]
  %s1552 = scalar_lea.vmem [#allocation2], 98
  %v1553 = vld [vmem:[%s1552] ss:$4 sm:$0xff]
  %s1554 = scalar_lea.vmem [#allocation2], 130
  %v1555 = vld [vmem:[%s1554] ss:$4 sm:$0xff]
  %s1556 = scalar_lea.vmem [#allocation2], 162
  %v1557 = vld [vmem:[%s1556] ss:$4 sm:$0xff]
  %s1558 = scalar_lea.vmem [#allocation2], 194
  %v1559 = vld [vmem:[%s1558] ss:$4 sm:$0xff]
  %s1560 = scalar_lea.vmem [#allocation2], 226
  %v1561 = vld [vmem:[%s1560] ss:$4 sm:$0xff]
  %s1562 = scalar_lea.vmem [#allocation2], 258
  %v1563 = vld [vmem:[%s1562] ss:$4 sm:$0xff]
  %s1564 = scalar_lea.vmem [#allocation2], 290
  %v1565 = vld [vmem:[%s1564] ss:$4 sm:$0xff]
  %s1566 = scalar_lea.vmem [#allocation2], 322
  %v1567 = vld [vmem:[%s1566] ss:$4 sm:$0xff]
  %s1568 = scalar_lea.vmem [#allocation2], 354
  %v1569 = vld [vmem:[%s1568] ss:$4 sm:$0xff]
  %s1570 = scalar_lea.vmem [#allocation2], 386
  %v1571 = vld [vmem:[%s1570] ss:$4 sm:$0xff]
  %s1572 = scalar_lea.vmem [#allocation2], 418
  %v1573 = vld [vmem:[%s1572] ss:$4 sm:$0xff]
  %s1574 = scalar_lea.vmem [#allocation2], 450
  %v1575 = vld [vmem:[%s1574] ss:$4 sm:$0xff]
  %s1576 = scalar_lea.vmem [#allocation2], 482
  %v1577 = vld [vmem:[%s1576] ss:$4 sm:$0xff]
  %s1578 = scalar_lea.vmem [#allocation2], 3
  %v1579 = vld [vmem:[%s1578] ss:$4 sm:$0xff]
  %s1580 = scalar_lea.vmem [#allocation2], 35
  %v1581 = vld [vmem:[%s1580] ss:$4 sm:$0xff]
  %s1582 = scalar_lea.vmem [#allocation2], 67
  %v1583 = vld [vmem:[%s1582] ss:$4 sm:$0xff]
  %s1584 = scalar_lea.vmem [#allocation2], 99
  %v1585 = vld [vmem:[%s1584] ss:$4 sm:$0xff]
  %s1586 = scalar_lea.vmem [#allocation2], 131
  %v1587 = vld [vmem:[%s1586] ss:$4 sm:$0xff]
  %s1588 = scalar_lea.vmem [#allocation2], 163
  %v1589 = vld [vmem:[%s1588] ss:$4 sm:$0xff]
  %s1590 = scalar_lea.vmem [#allocation2], 195
  %v1591 = vld [vmem:[%s1590] ss:$4 sm:$0xff]
  %s1592 = scalar_lea.vmem [#allocation2], 227
  %v1593 = vld [vmem:[%s1592] ss:$4 sm:$0xff]
  %s1594 = scalar_lea.vmem [#allocation2], 259
  %v1595 = vld [vmem:[%s1594] ss:$4 sm:$0xff]
  %s1596 = scalar_lea.vmem [#allocation2], 291
  %v1597 = vld [vmem:[%s1596] ss:$4 sm:$0xff]
  %s1598 = scalar_lea.vmem [#allocation2], 323
  %v1599 = vld [vmem:[%s1598] ss:$4 sm:$0xff]
  %s1600 = scalar_lea.vmem [#allocation2], 355
  %v1601 = vld [vmem:[%s1600] ss:$4 sm:$0xff]
  %s1602 = scalar_lea.vmem [#allocation2], 387
  %v1603 = vld [vmem:[%s1602] ss:$4 sm:$0xff]
  %s1604 = scalar_lea.vmem [#allocation2], 419
  %v1605 = vld [vmem:[%s1604] ss:$4 sm:$0xff]
  %s1606 = scalar_lea.vmem [#allocation2], 451
  %v1607 = vld [vmem:[%s1606] ss:$4 sm:$0xff]
  %s1608 = scalar_lea.vmem [#allocation2], 483
  %v1609 = vld [vmem:[%s1608] ss:$4 sm:$0xff]
  %v1610 = vmax.f32 %v1483, %v1515
  %v1611 = vmax.f32 %v1485, %v1517
  %v1612 = vmax.f32 %v1487, %v1519
  %v1613 = vmax.f32 %v1489, %v1521
  %v1614 = vmax.f32 %v1491, %v1523
  %v1615 = vmax.f32 %v1493, %v1525
  %v1616 = vmax.f32 %v1495, %v1527
  %v1617 = vmax.f32 %v1497, %v1529
  %v1618 = vmax.f32 %v1499, %v1531
  %v1619 = vmax.f32 %v1501, %v1533
  %v1620 = vmax.f32 %v1503, %v1535
  %v1621 = vmax.f32 %v1505, %v1537
  %v1622 = vmax.f32 %v1507, %v1539
  %v1623 = vmax.f32 %v1509, %v1541
  %v1624 = vmax.f32 %v1511, %v1543
  %v1625 = vmax.f32 %v1513, %v1545
  %v1626 = vmax.f32 %v1547, %v1579
  %v1627 = vmax.f32 %v1549, %v1581
  %v1628 = vmax.f32 %v1551, %v1583
  %v1629 = vmax.f32 %v1553, %v1585
  %v1630 = vmax.f32 %v1555, %v1587
  %v1631 = vmax.f32 %v1557, %v1589
  %v1632 = vmax.f32 %v1559, %v1591
  %v1633 = vmax.f32 %v1561, %v1593
  %v1634 = vmax.f32 %v1563, %v1595
  %v1635 = vmax.f32 %v1565, %v1597
  %v1636 = vmax.f32 %v1567, %v1599
  %v1637 = vmax.f32 %v1569, %v1601
  %v1638 = vmax.f32 %v1571, %v1603
  %v1639 = vmax.f32 %v1573, %v1605
  %v1640 = vmax.f32 %v1575, %v1607
  %v1641 = vmax.f32 %v1577, %v1609
  %v1642 = vmax.f32 %v1610, %v1626
  %v1643 = vmax.f32 %v1611, %v1627
  %v1644 = vmax.f32 %v1612, %v1628
  %v1645 = vmax.f32 %v1613, %v1629
  %v1646 = vmax.f32 %v1614, %v1630
  %v1647 = vmax.f32 %v1615, %v1631
  %v1648 = vmax.f32 %v1616, %v1632
  %v1649 = vmax.f32 %v1617, %v1633
  %v1650 = vmax.f32 %v1618, %v1634
  %v1651 = vmax.f32 %v1619, %v1635
  %v1652 = vmax.f32 %v1620, %v1636
  %v1653 = vmax.f32 %v1621, %v1637
  %v1654 = vmax.f32 %v1622, %v1638
  %v1655 = vmax.f32 %v1623, %v1639
  %v1656 = vmax.f32 %v1624, %v1640
  %v1657 = vmax.f32 %v1625, %v1641
  %1658 = vst.msk [vmem:[%s7] sm:$0xff] %vm95, %v1642
  %1659 = vst.msk [vmem:[%s7 + $0x8] sm:$0xff] %vm95, %v1643
  %1660 = vst.msk [vmem:[%s7 + $0x10] sm:$0xff] %vm95, %v1644
  %1661 = vst.msk [vmem:[%s7 + $0x18] sm:$0xff] %vm95, %v1645
  %1662 = vst.msk [vmem:[%s7 + $0x20] sm:$0xff] %vm95, %v1646
  %1663 = vst.msk [vmem:[%s7 + $0x28] sm:$0xff] %vm95, %v1647
  %1664 = vst.msk [vmem:[%s7 + $0x30] sm:$0xff] %vm95, %v1648
  %1665 = vst.msk [vmem:[%s7 + $0x38] sm:$0xff] %vm95, %v1649
  %1666 = vst.msk [vmem:[%s7 + $0x40] sm:$0xff] %vm95, %v1650
  %1667 = vst.msk [vmem:[%s7 + $0x48] sm:$0xff] %vm95, %v1651
  %1668 = vst.msk [vmem:[%s7 + $0x50] sm:$0xff] %vm95, %v1652
  %1669 = vst.msk [vmem:[%s7 + $0x58] sm:$0xff] %vm95, %v1653
  %1670 = vst.msk [vmem:[%s7 + $0x60] sm:$0xff] %vm95, %v1654
  %1671 = vst.msk [vmem:[%s7 + $0x68] sm:$0xff] %vm95, %v1655
  %1672 = vst.msk [vmem:[%s7 + $0x70] sm:$0xff] %vm95, %v1656
  %1673 = vst.msk [vmem:[%s7 + $0x78] sm:$0xff] %vm95, %v1657
  // Predicated region
  $region22: #{tpu_custom_call.1} parent=0 // pred_check
    _
  $region23: #{tpu_custom_call.1} parent=0 // pred_check_branch
    %1675 = sbr.rel (0) target = $region25
  $region24: #{tpu_custom_call.1} parent=0 // pred_region
    _
  $region25: #{tpu_custom_call.1} parent=0 // pred_fallthru
    _
  // Predicated region
  $region26: #{tpu_custom_call.1} parent=0 // pred_check
    _
  $region27: #{tpu_custom_call.1} parent=0 // pred_check_branch
    %1677 = sbr.rel (0) target = $region29
  $region28: #{tpu_custom_call.1} parent=0 // pred_region
    _
  $region29: #{tpu_custom_call.1} parent=0 // pred_fallthru
    _
  // Predicated region
  $region30: #{tpu_custom_call.1} parent=0 // pred_check
    _
  $region31: #{tpu_custom_call.1} parent=0 // pred_check_branch
    %1679 = sbr.rel (0) target = $region33
  $region32: #{tpu_custom_call.1} parent=0 // pred_region
    _
  $region33: #{tpu_custom_call.1} parent=0 // pred_fallthru
    _
  // Predicated region
  $region34: #{tpu_custom_call.1} parent=0 // pred_check
    _
  $region35: #{tpu_custom_call.1} parent=0 // pred_check_branch
    %1681 = sbr.rel (0) target = $region37
  $region36: #{tpu_custom_call.1} parent=0 // pred_region
    _
  $region37: #{tpu_custom_call.1} parent=0 // pred_fallthru
    _
  // Predicated region
  $region38: #{tpu_custom_call.1} parent=0 // pred_check
    _
  $region39: #{tpu_custom_call.1} parent=0 // pred_check_branch
    %1683 = sbr.rel (0) target = $region41
  $region40: #{tpu_custom_call.1} parent=0 // pred_region
    _
  $region41: #{tpu_custom_call.1} parent=0 // pred_fallthru
    _
  // Predicated region
  $region42: #{tpu_custom_call.1} parent=0 // pred_check
    _
  $region43: #{tpu_custom_call.1} parent=0 // pred_check_branch
    %1685 = sbr.rel (0) target = $region45
  $region44: #{tpu_custom_call.1} parent=0 // pred_region
    _
  $region45: #{tpu_custom_call.1} parent=0 // pred_fallthru
    _

</llo_original>
